<compile_context>
chip_gen: v7x
topology: tpu7x:2x2x1
jax: 0.10.0
libtpu: 0.0.40
codegen_flags: <defaults>
</compile_context>

<pallas_src>
from functools import partial

import jax
import jax.numpy as jnp
from jax.experimental import pallas as pl
from jax.experimental.pallas import tpu as pltpu

# ---- module hyper-parameters (from the PyTorch script) ----
INPUT_DIM = 3
CONDITION_DIM = 5
HIDDEN_DIM = 32
LATENT_DIM = 3
NUM_EMBEDDINGS = 100
NUM_LAYERS = 2
KERNEL_SIZE = 3

K_PAD = 128                      # codebook padded to one lane-dense vreg width
CN_DIM = CONDITION_DIM + INPUT_DIM   # [c | noise] width packed into lanes 100..107


def vqvae_kernel(
    xcol_ref, cnpad_ref,
    convw_ref, encw1_ref, encb1_ref,
    wdist_ref, bdist_ref,
    wq_ref, decb1_ref,
    decw2_ref, decb2_ref,
    decw3_ref, decb3_ref,
    out_ref,
):
    Lout, Bt, KC = xcol_ref.shape

    # ---------------- EncoderConv1 ----------------
    # conv (valid, k=3) as ONE im2col matmul; conv bias pre-folded into encb1.
    xcol = xcol_ref[...].reshape(Lout * Bt, KC)                 # (Lout*Bt, K*Cin)
    hc = jnp.dot(xcol, convw_ref[...],
                 preferred_element_type=jnp.float32)            # (Lout*Bt, H)

    # max over the sequence dim: pairwise TREE over Lout sublane-aligned
    # (Bt, H) slabs (Bt is a multiple of 8 -> slices never cross (8,128) tiles).
    slabs = [hc[l * Bt:(l + 1) * Bt, :] for l in range(Lout)]
    while len(slabs) > 1:
        nxt = [jnp.maximum(slabs[i], slabs[i + 1])
               for i in range(0, len(slabs) - 1, 2)]
        if len(slabs) % 2:
            nxt.append(slabs[-1])
        slabs = nxt
    hmax = slabs[0]                                             # (Bt, H)

    # hidden Linear(H, H) + ReLU  (num_layers - 1 == 1); conv bias pre-folded.
    h = jnp.maximum(
        jnp.dot(hmax, encw1_ref[...], preferred_element_type=jnp.float32)
        + encb1_ref[...], 0.0)                                  # (Bt, H)

    # ---------------- VectorQuantizer (folded) ----------------
    # scores[b, j] = ||e_j||^2 - 2 * z_e[b] . e_j  (same argmin as the true
    # squared distance; latent projection folded into W_dist / b_dist; padded
    # codebook lanes carry a +1e30 bias so they never win).
    scores = (jnp.dot(h, wdist_ref[...], preferred_element_type=jnp.float32)
              + bdist_ref[...])                                 # (Bt, 128)
    iota = jax.lax.broadcasted_iota(jnp.int32, scores.shape, 1)
    smin = jnp.min(scores, axis=-1, keepdims=True)
    # first-index tie-break == torch.argmin
    idx = jnp.min(jnp.where(scores == smin, iota, scores.shape[1]),
                  axis=-1, keepdims=True)                       # (Bt, 1) int32
    onehot = (iota == idx).astype(jnp.float32)                  # (Bt, 128)

    # ---------------- DecoderMLP ----------------
    # layer 1 fused into ONE 128-K matmul: onehot is zero on lanes >= 100,
    # cn_pad is nonzero only on lanes 100..107, so
    #   (onehot + cn_pad) @ wq_full == onehot @ (emb @ W1z) + c @ W1c + n @ W1n
    h1 = jnp.maximum(
        jnp.dot(onehot + cnpad_ref[...], wq_ref[...],
                preferred_element_type=jnp.float32)
        + decb1_ref[...], 0.0)
    h2 = jnp.maximum(
        jnp.dot(h1, decw2_ref[...], preferred_element_type=jnp.float32)
        + decb2_ref[...], 0.0)
    out_ref[...] = (jnp.dot(h2, decw3_ref[...], preferred_element_type=jnp.float32)
                    + decb3_ref[...])


def make_params(key):
    """Deterministic parameter init matching the PyTorch module's shapes."""
    ks = jax.random.split(key, 16)

    def unif(k, shape, bound):
        return jax.random.uniform(k, shape, jnp.float32, -bound, bound)

    p = {}
    # Conv1d(input_dim, hidden_dim, k=3): torch weight (H, Cin, K); stored (K, Cin, H)
    b = 1.0 / (INPUT_DIM * KERNEL_SIZE) ** 0.5
    p["conv_w"] = unif(ks[0], (KERNEL_SIZE, INPUT_DIM, HIDDEN_DIM), b)
    p["conv_b"] = unif(ks[1], (1, HIDDEN_DIM), b)
    # encoder hidden Linear(H, H) and latent Linear(H, latent), stored (in, out)
    b = 1.0 / HIDDEN_DIM ** 0.5
    p["enc_w1"] = unif(ks[2], (HIDDEN_DIM, HIDDEN_DIM), b)
    p["enc_b1"] = unif(ks[3], (1, HIDDEN_DIM), b)
    p["enc_lw"] = unif(ks[4], (HIDDEN_DIM, LATENT_DIM), b)
    p["enc_lb"] = unif(ks[5], (1, LATENT_DIM), b)
    # VQ embedding: U(-1/K, 1/K)
    p["emb"] = unif(ks[6], (NUM_EMBEDDINGS, LATENT_DIM), 1.0 / NUM_EMBEDDINGS)
    # decoder input layer Linear(latent+cond+input, H), split by input block
    in1 = LATENT_DIM + CONDITION_DIM + INPUT_DIM
    b = 1.0 / in1 ** 0.5
    w1 = unif(ks[7], (in1, HIDDEN_DIM), b)
    p["dec_w1z"] = w1[:LATENT_DIM]
    p["dec_w1c"] = w1[LATENT_DIM:LATENT_DIM + CONDITION_DIM]
    p["dec_w1n"] = w1[LATENT_DIM + CONDITION_DIM:]
    p["dec_b1"] = unif(ks[8], (1, HIDDEN_DIM), b)
    b = 1.0 / HIDDEN_DIM ** 0.5
    p["dec_w2"] = unif(ks[9], (HIDDEN_DIM, HIDDEN_DIM), b)
    p["dec_b2"] = unif(ks[10], (1, HIDDEN_DIM), b)
    p["dec_w3"] = unif(ks[11], (HIDDEN_DIM, INPUT_DIM), b)
    p["dec_b3"] = unif(ks[12], (1, INPUT_DIM), b)
    return p


@partial(jax.jit, static_argnames=("b_tile", "conv_in_bf16"))
def conditional_vqvae_forward(x, c, noise, params, *, b_tile=128, conv_in_bf16=False):
    """x: (B, L, C_in) channels-last, c: (B, cond), noise: (B, input).

    b_tile: batch tile (MXU M dim) per grid step; multiple of 8. For large B,
    128 (or 256 on v6e/v7x) fills MXU rows and the 1-D parallel grid lets v7x
    shard tiles across both TensorCores.
    conv_in_bf16: cast only the im2col input + conv weight to bf16 (f32
    accumulation) to halve the dominant HBM read on v5e/v6e.
    """
    B, L, Cin = x.shape
    Lout = L - KERNEL_SIZE + 1

    # ---- batch padding: tiles are multiples of 8 (sublane-aligned slices,
    # unmasked stores); output is sliced back to B afterwards.
    B8 = ((B + 7) // 8) * 8
    bt = max(8, (min(b_tile, B8) // 8) * 8)
    B_pad = ((B8 + bt - 1) // bt) * bt
    nb = B_pad // bt
    pad_b = B_pad - B

    xp = jnp.pad(x, ((0, pad_b), (0, 0), (0, 0)))
    cp = jnp.pad(c, ((0, pad_b), (0, 0)))
    npad = jnp.pad(noise, ((0, pad_b), (0, 0)))

    # ---- im2col as a rectangular 3-D (Lout, B_pad, K*Cin) array so a batch
    # tile is a plain BlockSpec block (no strided row sets).
    cols = jnp.concatenate([xp[:, k:k + Lout, :] for k in range(KERNEL_SIZE)],
                           axis=-1)                              # (B_pad, Lout, K*Cin)
    xcol = jnp.transpose(cols, (1, 0, 2))                        # (Lout, B_pad, K*Cin)

    convw_flat = params["conv_w"].reshape(KERNEL_SIZE * Cin, HIDDEN_DIM)
    if conv_in_bf16:
        xcol = xcol.astype(jnp.bfloat16)
        convw_flat = convw_flat.astype(jnp.bfloat16)

    # conv bias is constant over the max'ed dim -> fold into hidden-layer bias:
    # relu((hmax + cb) @ W1 + b1) == relu(hmax @ W1 + (cb @ W1 + b1))
    encb1_fused = params["conv_b"] @ params["enc_w1"] + params["enc_b1"]

    # VQ distance fold (argmin invariant to the row-constant ||z_e||^2 term),
    # codebook padded to 128 lanes; padded columns get a huge bias.
    emb_pad = jnp.zeros((K_PAD, LATENT_DIM), jnp.float32).at[:NUM_EMBEDDINGS].set(params["emb"])
    emb_t = emb_pad.T                                            # (latent, 128)
    w_dist = -2.0 * (params["enc_lw"] @ emb_t)                   # (H, 128)
    e2 = jnp.sum(emb_pad * emb_pad, axis=1)[None, :]             # (1, 128)
    b_dist = e2 - 2.0 * (params["enc_lb"] @ emb_t)               # (1, 128)
    b_dist = jnp.where(jnp.arange(K_PAD)[None, :] < NUM_EMBEDDINGS, b_dist, 1e30)

    # fused decoder layer-1 weight: rows 0..99 = emb @ W1z (codebook fold),
    # rows 100..107 = [W1c; W1n], rows 108..127 = 0.
    wq_full = jnp.zeros((K_PAD, HIDDEN_DIM), jnp.float32)
    wq_full = wq_full.at[:NUM_EMBEDDINGS].set(params["emb"] @ params["dec_w1z"])
    wq_full = wq_full.at[NUM_EMBEDDINGS:NUM_EMBEDDINGS + CN_DIM].set(
        jnp.concatenate([params["dec_w1c"], params["dec_w1n"]], axis=0))

    # pack [c | noise] into lanes 100..107 of a (B_pad, 128) slab.
    cn_pad = jnp.zeros((B_pad, K_PAD), jnp.float32)
    cn_pad = cn_pad.at[:, NUM_EMBEDDINGS:NUM_EMBEDDINGS + CN_DIM].set(
        jnp.concatenate([cp, npad], axis=1))

    def resident(shape):
        # full-array block with a constant index_map -> stays VMEM-resident
        # across grid steps (no re-DMA of weights/biases).
        return pl.BlockSpec(shape, lambda i, _s=len(shape): (0,) * _s)

    in_specs = [
        pl.BlockSpec((Lout, bt, KERNEL_SIZE * Cin), lambda i: (0, i, 0)),  # xcol
        pl.BlockSpec((bt, K_PAD), lambda i: (i, 0)),                       # cn_pad
        resident((KERNEL_SIZE * Cin, HIDDEN_DIM)),                         # convw
        resident((HIDDEN_DIM, HIDDEN_DIM)),                                # enc_w1
        resident((1, HIDDEN_DIM)),                                         # encb1_fused
        resident((HIDDEN_DIM, K_PAD)),                                     # w_dist
        resident((1, K_PAD)),                                              # b_dist
        resident((K_PAD, HIDDEN_DIM)),                                     # wq_full
        resident((1, HIDDEN_DIM)),                                         # dec_b1
        resident((HIDDEN_DIM, HIDDEN_DIM)),                                # dec_w2
        resident((1, HIDDEN_DIM)),                                         # dec_b2
        resident((HIDDEN_DIM, INPUT_DIM)),                                 # dec_w3
        resident((1, INPUT_DIM)),                                          # dec_b3
    ]

    out = pl.pallas_call(
        vqvae_kernel,
        out_shape=jax.ShapeDtypeStruct((B_pad, INPUT_DIM), jnp.float32),
        grid=(nb,),
        in_specs=in_specs,
        # output kept 3 lanes wide on purpose (padding to 128 would ~43x the
        # HBM writeback for no benefit).
        out_specs=pl.BlockSpec((bt, INPUT_DIM), lambda i: (i, 0)),
        compiler_params=pltpu.CompilerParams(
            dimension_semantics=("parallel",)),
    )(xcol, cn_pad,
      convw_flat, params["enc_w1"], encb1_fused,
      w_dist, b_dist,
      wq_full, params["dec_b1"],
      params["dec_w2"], params["dec_b2"],
      params["dec_w3"], params["dec_b3"])

    return out[:B]


def reference_forward(x, c, noise, p):
    """Pure-JAX, unfused reference of the intended PyTorch forward."""
    B, L, Cin = x.shape
    Lout = L - KERNEL_SIZE + 1
    cols = jnp.concatenate([x[:, k:k + Lout, :] for k in range(KERNEL_SIZE)], axis=-1)
    convw = p["conv_w"].reshape(KERNEL_SIZE * Cin, HIDDEN_DIM)
    conv = jnp.einsum("blk,kh->blh", cols, convw) + p["conv_b"]   # (B, Lout, H)
    hmax = jnp.max(conv, axis=1)                                  # torch.max over seq
    h = jax.nn.relu(hmax @ p["enc_w1"] + p["enc_b1"])
    z_e = h @ p["enc_lw"] + p["enc_lb"]
    # argmin of ||z_e - e_j||^2; the per-row ||z_e||^2 term is argmin-invariant.
    d = jnp.sum(p["emb"] ** 2, axis=1)[None, :] - 2.0 * z_e @ p["emb"].T
    idx = jnp.argmin(d, axis=1)
    z_q = p["emb"][idx]                                           # straight-through fwd value
    h1 = jax.nn.relu(z_q @ p["dec_w1z"] + c @ p["dec_w1c"]
                     + noise @ p["dec_w1n"] + p["dec_b1"])
    h2 = jax.nn.relu(h1 @ p["dec_w2"] + p["dec_b2"])
    return h2 @ p["dec_w3"] + p["dec_b3"]


if __name__ == "__main__":
    key = jax.random.PRNGKey(0)
    kx, kc, kn, kp = jax.random.split(key, 4)

    # Small but grid-exercising shapes: B=64 with b_tile=32 -> grid=(2,),
    # Conv1d valid output length = 14.
    B, L = 64, 16
    x = jax.random.normal(kx, (B, L, INPUT_DIM), jnp.float32)   # channels-last
    c = jax.random.normal(kc, (B, CONDITION_DIM), jnp.float32)
    noise = jax.random.normal(kn, (B, INPUT_DIM), jnp.float32)

    params = make_params(kp)

    out = conditional_vqvae_forward(x, c, noise, params, b_tile=32)
    out = jax.block_until_ready(out)
    assert out.shape == (B, INPUT_DIM) and out.dtype == jnp.float32
    assert bool(jnp.all(jnp.isfinite(out)))

    # Correctness vs. unfused reference.  A rare FP near-tie in the codebook
    # argmin can flip a single row discretely; allow at most one such row.
    ref = reference_forward(x, c, noise, params)
    per_row_err = jnp.max(jnp.abs(out - ref), axis=1)
    assert int(jnp.sum(per_row_err > 1e-3)) <= 1

    print("KERNEL_OK")
</pallas_src>

<mosaic_0001>
module attributes {stable_mosaic.version = 11 : i64} {
  func.func @vqvae_kernel(%arg0: i32, %arg1: memref<14x32x9xf32, #tpu.memory_space<vmem>>, %arg2: memref<32x128xf32, #tpu.memory_space<vmem>>, %arg3: memref<9x32xf32, #tpu.memory_space<vmem>>, %arg4: memref<32x32xf32, #tpu.memory_space<vmem>>, %arg5: memref<1x32xf32, #tpu.memory_space<vmem>>, %arg6: memref<32x128xf32, #tpu.memory_space<vmem>>, %arg7: memref<1x128xf32, #tpu.memory_space<vmem>>, %arg8: memref<128x32xf32, #tpu.memory_space<vmem>>, %arg9: memref<1x32xf32, #tpu.memory_space<vmem>>, %arg10: memref<32x32xf32, #tpu.memory_space<vmem>>, %arg11: memref<1x32xf32, #tpu.memory_space<vmem>>, %arg12: memref<32x3xf32, #tpu.memory_space<vmem>>, %arg13: memref<1x3xf32, #tpu.memory_space<vmem>>, %arg14: memref<32x3xf32, #tpu.memory_space<vmem>>) attributes {dimension_semantics = [#tpu.dimension_semantics<parallel>], iteration_bounds = array<i64: 2>, scalar_prefetch = 0 : i64, scratch_operands = 0 : i64, tpu.core_type = #tpu.core_type<tc>, window_params = [{transform_indices = @transform_0, window_bounds = array<i64: 14, 32, 9>}, {transform_indices = @transform_1, window_bounds = array<i64: 32, 128>}, {pipeline_mode = #tpu.pipeline_mode<synchronous>, transform_indices = @transform_2, window_bounds = array<i64: 9, 32>}, {pipeline_mode = #tpu.pipeline_mode<synchronous>, transform_indices = @transform_3, window_bounds = array<i64: 32, 32>}, {pipeline_mode = #tpu.pipeline_mode<synchronous>, transform_indices = @transform_4, window_bounds = array<i64: 1, 32>}, {pipeline_mode = #tpu.pipeline_mode<synchronous>, transform_indices = @transform_5, window_bounds = array<i64: 32, 128>}, {pipeline_mode = #tpu.pipeline_mode<synchronous>, transform_indices = @transform_6, window_bounds = array<i64: 1, 128>}, {pipeline_mode = #tpu.pipeline_mode<synchronous>, transform_indices = @transform_7, window_bounds = array<i64: 128, 32>}, {pipeline_mode = #tpu.pipeline_mode<synchronous>, transform_indices = @transform_8, window_bounds = array<i64: 1, 32>}, {pipeline_mode = #tpu.pipeline_mode<synchronous>, transform_indices = @transform_9, window_bounds = array<i64: 32, 32>}, {pipeline_mode = #tpu.pipeline_mode<synchronous>, transform_indices = @transform_10, window_bounds = array<i64: 1, 32>}, {pipeline_mode = #tpu.pipeline_mode<synchronous>, transform_indices = @transform_11, window_bounds = array<i64: 32, 3>}, {pipeline_mode = #tpu.pipeline_mode<synchronous>, transform_indices = @transform_12, window_bounds = array<i64: 1, 3>}, {transform_indices = @transform_13, window_bounds = array<i64: 32, 3>}]} {
    %c0 = arith.constant 0 : index
    %c0_0 = arith.constant 0 : index
    %c0_1 = arith.constant 0 : index
    %0 = vector.load %arg1[%c0, %c0_0, %c0_1] : memref<14x32x9xf32, #tpu.memory_space<vmem>>, vector<14x32x9xf32>
    %1 = vector.shape_cast %0 : vector<14x32x9xf32> to vector<448x9xf32>
    %c0_2 = arith.constant 0 : index
    %c0_3 = arith.constant 0 : index
    %2 = vector.load %arg3[%c0_2, %c0_3] : memref<9x32xf32, #tpu.memory_space<vmem>>, vector<9x32xf32>
    %cst = arith.constant dense<0.000000e+00> : vector<448x32xf32>
    %3 = tpu.matmul %1, %2, %cst {dimension_numbers = #tpu.dot_dimension_numbers<[1], [0], [0], [1], [0, 0, 1, 1], [], []>} : vector<448x9xf32>, vector<9x32xf32>, vector<448x32xf32> -> vector<448x32xf32>
    %4 = vector.extract_strided_slice %3 {offsets = [0, 0], sizes = [32, 32], strides = [1, 1]} : vector<448x32xf32> to vector<32x32xf32>
    %5 = vector.extract_strided_slice %3 {offsets = [32, 0], sizes = [32, 32], strides = [1, 1]} : vector<448x32xf32> to vector<32x32xf32>
    %6 = vector.extract_strided_slice %3 {offsets = [64, 0], sizes = [32, 32], strides = [1, 1]} : vector<448x32xf32> to vector<32x32xf32>
    %7 = vector.extract_strided_slice %3 {offsets = [96, 0], sizes = [32, 32], strides = [1, 1]} : vector<448x32xf32> to vector<32x32xf32>
    %8 = vector.extract_strided_slice %3 {offsets = [128, 0], sizes = [32, 32], strides = [1, 1]} : vector<448x32xf32> to vector<32x32xf32>
    %9 = vector.extract_strided_slice %3 {offsets = [160, 0], sizes = [32, 32], strides = [1, 1]} : vector<448x32xf32> to vector<32x32xf32>
    %10 = vector.extract_strided_slice %3 {offsets = [192, 0], sizes = [32, 32], strides = [1, 1]} : vector<448x32xf32> to vector<32x32xf32>
    %11 = vector.extract_strided_slice %3 {offsets = [224, 0], sizes = [32, 32], strides = [1, 1]} : vector<448x32xf32> to vector<32x32xf32>
    %12 = vector.extract_strided_slice %3 {offsets = [256, 0], sizes = [32, 32], strides = [1, 1]} : vector<448x32xf32> to vector<32x32xf32>
    %13 = vector.extract_strided_slice %3 {offsets = [288, 0], sizes = [32, 32], strides = [1, 1]} : vector<448x32xf32> to vector<32x32xf32>
    %14 = vector.extract_strided_slice %3 {offsets = [320, 0], sizes = [32, 32], strides = [1, 1]} : vector<448x32xf32> to vector<32x32xf32>
    %15 = vector.extract_strided_slice %3 {offsets = [352, 0], sizes = [32, 32], strides = [1, 1]} : vector<448x32xf32> to vector<32x32xf32>
    %16 = vector.extract_strided_slice %3 {offsets = [384, 0], sizes = [32, 32], strides = [1, 1]} : vector<448x32xf32> to vector<32x32xf32>
    %17 = vector.extract_strided_slice %3 {offsets = [416, 0], sizes = [32, 32], strides = [1, 1]} : vector<448x32xf32> to vector<32x32xf32>
    %18 = arith.maximumf %4, %5 : vector<32x32xf32>
    %19 = arith.maximumf %6, %7 : vector<32x32xf32>
    %20 = arith.maximumf %8, %9 : vector<32x32xf32>
    %21 = arith.maximumf %10, %11 : vector<32x32xf32>
    %22 = arith.maximumf %12, %13 : vector<32x32xf32>
    %23 = arith.maximumf %14, %15 : vector<32x32xf32>
    %24 = arith.maximumf %16, %17 : vector<32x32xf32>
    %25 = arith.maximumf %18, %19 : vector<32x32xf32>
    %26 = arith.maximumf %20, %21 : vector<32x32xf32>
    %27 = arith.maximumf %22, %23 : vector<32x32xf32>
    %28 = arith.maximumf %25, %26 : vector<32x32xf32>
    %29 = arith.maximumf %27, %24 : vector<32x32xf32>
    %30 = arith.maximumf %28, %29 : vector<32x32xf32>
    %c0_4 = arith.constant 0 : index
    %c0_5 = arith.constant 0 : index
    %31 = vector.load %arg4[%c0_4, %c0_5] : memref<32x32xf32, #tpu.memory_space<vmem>>, vector<32x32xf32>
    %cst_6 = arith.constant dense<0.000000e+00> : vector<32x32xf32>
    %32 = tpu.matmul %30, %31, %cst_6 {dimension_numbers = #tpu.dot_dimension_numbers<[1], [0], [0], [1], [0, 0, 1, 1], [], []>} : vector<32x32xf32>, vector<32x32xf32>, vector<32x32xf32> -> vector<32x32xf32>
    %c0_7 = arith.constant 0 : index
    %c0_8 = arith.constant 0 : index
    %33 = vector.load %arg5[%c0_7, %c0_8] : memref<1x32xf32, #tpu.memory_space<vmem>>, vector<1x32xf32>
    %34 = vector.broadcast %33 : vector<1x32xf32> to vector<32x32xf32>
    %35 = arith.addf %32, %34 : vector<32x32xf32>
    %cst_9 = arith.constant 0.000000e+00 : f32
    %36 = vector.broadcast %cst_9 : f32 to vector<32x32xf32>
    %37 = arith.maximumf %35, %36 : vector<32x32xf32>
    %c0_10 = arith.constant 0 : index
    %c0_11 = arith.constant 0 : index
    %38 = vector.load %arg6[%c0_10, %c0_11] : memref<32x128xf32, #tpu.memory_space<vmem>>, vector<32x128xf32>
    %cst_12 = arith.constant dense<0.000000e+00> : vector<32x128xf32>
    %39 = tpu.matmul %37, %38, %cst_12 {dimension_numbers = #tpu.dot_dimension_numbers<[1], [0], [0], [1], [0, 0, 1, 1], [], []>} : vector<32x32xf32>, vector<32x128xf32>, vector<32x128xf32> -> vector<32x128xf32>
    %c0_13 = arith.constant 0 : index
    %c0_14 = arith.constant 0 : index
    %40 = vector.load %arg7[%c0_13, %c0_14] : memref<1x128xf32, #tpu.memory_space<vmem>>, vector<1x128xf32>
    %41 = vector.broadcast %40 : vector<1x128xf32> to vector<32x128xf32>
    %42 = arith.addf %39, %41 : vector<32x128xf32>
    %43 = tpu.iota {dimensions = array<i32: 1>} : vector<32x128xi32>
    %cst_15 = arith.constant dense<0x7F800000> : vector<32xf32>
    %44 = vector.multi_reduction <minimumf>, %42, %cst_15 [1] : vector<32x128xf32> to vector<32xf32>
    %45 = vector.shape_cast %44 : vector<32xf32> to vector<32x1xf32>
    %46 = vector.broadcast %45 : vector<32x1xf32> to vector<32x128xf32>
    %47 = arith.cmpf oeq, %42, %46 : vector<32x128xf32>
    %c128_i32 = arith.constant 128 : i32
    %48 = vector.broadcast %c128_i32 : i32 to vector<32x128xi32>
    %49 = arith.select %47, %43, %48 : vector<32x128xi1>, vector<32x128xi32>
    %cst_16 = arith.constant dense<2147483647> : vector<32xi32>
    %50 = vector.multi_reduction <minsi>, %49, %cst_16 [1] : vector<32x128xi32> to vector<32xi32>
    %51 = vector.shape_cast %50 : vector<32xi32> to vector<32x1xi32>
    %52 = vector.broadcast %51 : vector<32x1xi32> to vector<32x128xi32>
    %53 = arith.cmpi eq, %43, %52 : vector<32x128xi32>
    %54 = arith.extui %53 : vector<32x128xi1> to vector<32x128xi32>
    %55 = arith.sitofp %54 : vector<32x128xi32> to vector<32x128xf32>
    %c0_17 = arith.constant 0 : index
    %c0_18 = arith.constant 0 : index
    %56 = vector.load %arg2[%c0_17, %c0_18] : memref<32x128xf32, #tpu.memory_space<vmem>>, vector<32x128xf32>
    %57 = arith.addf %55, %56 : vector<32x128xf32>
    %c0_19 = arith.constant 0 : index
    %c0_20 = arith.constant 0 : index
    %58 = vector.load %arg8[%c0_19, %c0_20] : memref<128x32xf32, #tpu.memory_space<vmem>>, vector<128x32xf32>
    %cst_21 = arith.constant dense<0.000000e+00> : vector<32x32xf32>
    %59 = tpu.matmul %57, %58, %cst_21 {dimension_numbers = #tpu.dot_dimension_numbers<[1], [0], [0], [1], [0, 0, 1, 1], [], []>} : vector<32x128xf32>, vector<128x32xf32>, vector<32x32xf32> -> vector<32x32xf32>
    %c0_22 = arith.constant 0 : index
    %c0_23 = arith.constant 0 : index
    %60 = vector.load %arg9[%c0_22, %c0_23] : memref<1x32xf32, #tpu.memory_space<vmem>>, vector<1x32xf32>
    %61 = vector.broadcast %60 : vector<1x32xf32> to vector<32x32xf32>
    %62 = arith.addf %59, %61 : vector<32x32xf32>
    %cst_24 = arith.constant 0.000000e+00 : f32
    %63 = vector.broadcast %cst_24 : f32 to vector<32x32xf32>
    %64 = arith.maximumf %62, %63 : vector<32x32xf32>
    %c0_25 = arith.constant 0 : index
    %c0_26 = arith.constant 0 : index
    %65 = vector.load %arg10[%c0_25, %c0_26] : memref<32x32xf32, #tpu.memory_space<vmem>>, vector<32x32xf32>
    %cst_27 = arith.constant dense<0.000000e+00> : vector<32x32xf32>
    %66 = tpu.matmul %64, %65, %cst_27 {dimension_numbers = #tpu.dot_dimension_numbers<[1], [0], [0], [1], [0, 0, 1, 1], [], []>} : vector<32x32xf32>, vector<32x32xf32>, vector<32x32xf32> -> vector<32x32xf32>
    %c0_28 = arith.constant 0 : index
    %c0_29 = arith.constant 0 : index
    %67 = vector.load %arg11[%c0_28, %c0_29] : memref<1x32xf32, #tpu.memory_space<vmem>>, vector<1x32xf32>
    %68 = vector.broadcast %67 : vector<1x32xf32> to vector<32x32xf32>
    %69 = arith.addf %66, %68 : vector<32x32xf32>
    %cst_30 = arith.constant 0.000000e+00 : f32
    %70 = vector.broadcast %cst_30 : f32 to vector<32x32xf32>
    %71 = arith.maximumf %69, %70 : vector<32x32xf32>
    %c0_31 = arith.constant 0 : index
    %c0_32 = arith.constant 0 : index
    %72 = vector.load %arg12[%c0_31, %c0_32] : memref<32x3xf32, #tpu.memory_space<vmem>>, vector<32x3xf32>
    %cst_33 = arith.constant dense<0.000000e+00> : vector<32x3xf32>
    %73 = tpu.matmul %71, %72, %cst_33 {dimension_numbers = #tpu.dot_dimension_numbers<[1], [0], [0], [1], [0, 0, 1, 1], [], []>} : vector<32x32xf32>, vector<32x3xf32>, vector<32x3xf32> -> vector<32x3xf32>
    %c0_34 = arith.constant 0 : index
    %c0_35 = arith.constant 0 : index
    %74 = vector.load %arg13[%c0_34, %c0_35] : memref<1x3xf32, #tpu.memory_space<vmem>>, vector<1x3xf32>
    %75 = vector.broadcast %74 : vector<1x3xf32> to vector<32x3xf32>
    %76 = arith.addf %73, %75 : vector<32x3xf32>
    %c0_36 = arith.constant 0 : index
    %c0_37 = arith.constant 0 : index
    %77 = vector.load %arg14[%c0_36, %c0_37] : memref<32x3xf32, #tpu.memory_space<vmem>>, vector<32x3xf32>
    tpu.vector_store %arg14[%c0_36, %c0_37], %76 {strides = array<i32>} : memref<32x3xf32, #tpu.memory_space<vmem>>, vector<32x3xf32>,
    return
  }
  func.func @transform_0(%arg0: i32) -> (i32, i32, i32) {
    %c0_i32 = arith.constant 0 : i32
    %c0_i32_0 = arith.constant 0 : i32
    %c0_i32_1 = arith.constant 0 : i32
    return %c0_i32, %arg0, %c0_i32_0 : i32, i32, i32
  }
  func.func @transform_1(%arg0: i32) -> (i32, i32) {
    %c0_i32 = arith.constant 0 : i32
    %c0_i32_0 = arith.constant 0 : i32
    return %arg0, %c0_i32 : i32, i32
  }
  func.func @transform_2(%arg0: i32) -> (i32, i32) {
    %c0_i32 = arith.constant 0 : i32
    %c0_i32_0 = arith.constant 0 : i32
    %c0_i32_1 = arith.constant 0 : i32
    return %c0_i32, %c0_i32_0 : i32, i32
  }
  func.func @transform_3(%arg0: i32) -> (i32, i32) {
    %c0_i32 = arith.constant 0 : i32
    %c0_i32_0 = arith.constant 0 : i32
    %c0_i32_1 = arith.constant 0 : i32
    return %c0_i32, %c0_i32_0 : i32, i32
  }
  func.func @transform_4(%arg0: i32) -> (i32, i32) {
    %c0_i32 = arith.constant 0 : i32
    %c0_i32_0 = arith.constant 0 : i32
    %c0_i32_1 = arith.constant 0 : i32
    return %c0_i32, %c0_i32_0 : i32, i32
  }
  func.func @transform_5(%arg0: i32) -> (i32, i32) {
    %c0_i32 = arith.constant 0 : i32
    %c0_i32_0 = arith.constant 0 : i32
    %c0_i32_1 = arith.constant 0 : i32
    return %c0_i32, %c0_i32_0 : i32, i32
  }
  func.func @transform_6(%arg0: i32) -> (i32, i32) {
    %c0_i32 = arith.constant 0 : i32
    %c0_i32_0 = arith.constant 0 : i32
    %c0_i32_1 = arith.constant 0 : i32
    return %c0_i32, %c0_i32_0 : i32, i32
  }
  func.func @transform_7(%arg0: i32) -> (i32, i32) {
    %c0_i32 = arith.constant 0 : i32
    %c0_i32_0 = arith.constant 0 : i32
    %c0_i32_1 = arith.constant 0 : i32
    return %c0_i32, %c0_i32_0 : i32, i32
  }
  func.func @transform_8(%arg0: i32) -> (i32, i32) {
    %c0_i32 = arith.constant 0 : i32
    %c0_i32_0 = arith.constant 0 : i32
    %c0_i32_1 = arith.constant 0 : i32
    return %c0_i32, %c0_i32_0 : i32, i32
  }
  func.func @transform_9(%arg0: i32) -> (i32, i32) {
    %c0_i32 = arith.constant 0 : i32
    %c0_i32_0 = arith.constant 0 : i32
    %c0_i32_1 = arith.constant 0 : i32
    return %c0_i32, %c0_i32_0 : i32, i32
  }
  func.func @transform_10(%arg0: i32) -> (i32, i32) {
    %c0_i32 = arith.constant 0 : i32
    %c0_i32_0 = arith.constant 0 : i32
    %c0_i32_1 = arith.constant 0 : i32
    return %c0_i32, %c0_i32_0 : i32, i32
  }
  func.func @transform_11(%arg0: i32) -> (i32, i32) {
    %c0_i32 = arith.constant 0 : i32
    %c0_i32_0 = arith.constant 0 : i32
    %c0_i32_1 = arith.constant 0 : i32
    return %c0_i32, %c0_i32_0 : i32, i32
  }
  func.func @transform_12(%arg0: i32) -> (i32, i32) {
    %c0_i32 = arith.constant 0 : i32
    %c0_i32_0 = arith.constant 0 : i32
    %c0_i32_1 = arith.constant 0 : i32
    return %c0_i32, %c0_i32_0 : i32, i32
  }
  func.func @transform_13(%arg0: i32) -> (i32, i32) {
    %c0_i32 = arith.constant 0 : i32
    %c0_i32_0 = arith.constant 0 : i32
    return %arg0, %c0_i32 : i32, i32
  }
}

</mosaic_0001>

<llo_original>
// kernel: conditional_vqvae_forward.1
$region0: #{conditional_vqvae_forward.1}
  #allocation0 [shape = 'u32[]', space=smem, size = 0x4, offset = 0x4, fixed_abs, tag = 'smem constant byte address 0x4 - core index']
  #allocation1 [shape = 'u32[144,128]{1,0:T(1,128)}', space=vmem, size = 0x12000, scoped, tag = 'internal scratch']
  %s0 = inlined_call_operand.vmem [shape: f32[14,64,9], index: 0, kind: input, shape index: {}]
  %s1 = inlined_call_operand.vmem [shape: f32[64,128], index: 1, kind: input, shape index: {}]
  %s2 = inlined_call_operand.vmem [shape: f32[9,32], index: 2, kind: input, shape index: {}]
  %s3 = inlined_call_operand.vmem [shape: f32[32,32], index: 3, kind: input, shape index: {}]
  %s4 = inlined_call_operand.vmem [shape: f32[1,32], index: 4, kind: input, shape index: {}]
  %s5 = inlined_call_operand.vmem [shape: f32[32,128], index: 5, kind: input, shape index: {}]
  %s6 = inlined_call_operand.vmem [shape: f32[1,128], index: 6, kind: input, shape index: {}]
  %s7 = inlined_call_operand.vmem [shape: f32[128,32], index: 7, kind: input, shape index: {}]
  %s8 = inlined_call_operand.vmem [shape: f32[1,32], index: 8, kind: input, shape index: {}]
  %s9 = inlined_call_operand.vmem [shape: f32[32,32], index: 9, kind: input, shape index: {}]
  %s10 = inlined_call_operand.vmem [shape: f32[1,32], index: 10, kind: input, shape index: {}]
  %s11 = inlined_call_operand.vmem [shape: f32[32,3], index: 11, kind: input, shape index: {}]
  %s12 = inlined_call_operand.vmem [shape: f32[1,3], index: 12, kind: input, shape index: {}]
  %s13 = inlined_call_operand.vmem [shape: f32[64,3], index: 13, kind: output, shape index: {}]
  %s14 = sld [smem:[#allocation0]]
  $region123: #{conditional_vqvae_forward.1} parent=0
    _
  %s16 = ssub.s32 1, %s14
  %s17 = scalar_select 0, %s16, %s14
  $region1: #{conditional_vqvae_forward.1} parent=0
    #allocation2 [shape = 'u8[458752]{0}', space=vmem, size = 0x70000, scoped, tag = 'input window, operand 0']
    loop: start=0, step=1, limit=4
    $region2: #{conditional_vqvae_forward.1} parent=1 // loop_pre_header
      _
    $region3: #{conditional_vqvae_forward.1} parent=1 // loop_header
      %s19 = sphi 0, %s23
      %p20 = scmp.ge.s32.totalorder %s19, 4
      %s29 = sphi 0, %s31
      %s32 = sphi 0, %s29
      %s33 = sphi 0, %s32
      %s49 = sphi 0, %s33
      %s55 = sphi 0, %s57
      %s58 = sphi 0, %s55
      %s59 = sphi 0, %s58
      %s75 = sphi 0, %s59
      %s79 = sphi 0, %s79
      %s81 = sphi 0, %s79
      %s82 = sphi 0, %s81
      %s96 = sphi 0, %s82
      %s100 = sphi 0, %s100
      %s102 = sphi 0, %s100
      %s103 = sphi 0, %s102
      %s117 = sphi 0, %s103
      %s121 = sphi 0, %s121
      %s123 = sphi 0, %s121
      %s124 = sphi 0, %s123
      %s138 = sphi 0, %s124
      %s142 = sphi 0, %s142
      %s144 = sphi 0, %s142
      %s145 = sphi 0, %s144
      %s159 = sphi 0, %s145
      %s163 = sphi 0, %s163
      %s165 = sphi 0, %s163
      %s166 = sphi 0, %s165
      %s180 = sphi 0, %s166
      %s184 = sphi 0, %s184
      %s186 = sphi 0, %s184
      %s187 = sphi 0, %s186
      %s201 = sphi 0, %s187
      %s205 = sphi 0, %s205
      %s207 = sphi 0, %s205
      %s208 = sphi 0, %s207
      %s222 = sphi 0, %s208
      %s226 = sphi 0, %s226
      %s228 = sphi 0, %s226
      %s229 = sphi 0, %s228
      %s243 = sphi 0, %s229
      %s247 = sphi 0, %s247
      %s249 = sphi 0, %s247
      %s250 = sphi 0, %s249
      %s264 = sphi 0, %s250
      %s268 = sphi 0, %s268
      %s270 = sphi 0, %s268
      %s271 = sphi 0, %s270
      %s285 = sphi 0, %s271
      %s289 = sphi 0, %s289
      %s291 = sphi 0, %s289
      %s292 = sphi 0, %s291
      %s306 = sphi 0, %s292
      %s312 = sphi 0, %s314
      %s315 = sphi 0, %s312
      %s316 = sphi 0, %s315
      %s332 = sphi 0, %s316
    $region4: #{conditional_vqvae_forward.1} parent=1 // loop_header_branch
      %22 = sbr.rel (%p20) target = $region8
    $region5: #{conditional_vqvae_forward.1} parent=1 // loop_body
      %s24 = ssub.s32 %s19, 1
      %s25 = ssub.s32 %s19, 2
      %s26 = sadd.s32 %s19, 1
      %s27 = ssub.s32 %s19, %s26
      %p28 = scmp.eq.s32.totalorder %s27, 0
      %s30 = sadd.s32 %s29, 1
      %s31 = scalar_select %p28, %s29, %s30
      %p34 = pneg %p28
      %p35 = scmp.eq.s32.totalorder %s19, 1
      %p36 = por %p34, %p35
      %p37 = scmp.ne.s32.totalorder %s29, %s32
      %p38 = scmp.eq.s32.totalorder %s19, 0
      %p39 = por %p37, %p38
      %p40 = scmp.ne.s32.totalorder %s29, %s32
      %p41 = scmp.eq.s32.totalorder %s24, 1
      %p42 = por %p40, %p41
      %p43 = scmp.ne.s32.totalorder %s32, %s33
      %p44 = scmp.eq.s32.totalorder %s24, 0
      %p45 = por %p43, %p44
      %p46 = scmp.ne.s32.totalorder %s32, %s33
      %p47 = scmp.eq.s32.totalorder %s25, 1
      %p48 = por %p46, %p47
      %p50 = scmp.ne.s32.totalorder %s33, %s49
      %p51 = scmp.eq.s32.totalorder %s25, 0
      %p52 = por %p50, %p51
      %s53 = ssub.s32 %s19, %s26
      %p54 = scmp.eq.s32.totalorder %s53, 0
      %s56 = sadd.s32 %s55, 1
      %s57 = scalar_select %p54, %s55, %s56
      %p60 = pneg %p54
      %p61 = scmp.eq.s32.totalorder %s19, 1
      %p62 = por %p60, %p61
      %p63 = scmp.ne.s32.totalorder %s55, %s58
      %p64 = scmp.eq.s32.totalorder %s19, 0
      %p65 = por %p63, %p64
      %p66 = scmp.ne.s32.totalorder %s55, %s58
      %p67 = scmp.eq.s32.totalorder %s24, 1
      %p68 = por %p66, %p67
      %p69 = scmp.ne.s32.totalorder %s58, %s59
      %p70 = scmp.eq.s32.totalorder %s24, 0
      %p71 = por %p69, %p70
      %p72 = scmp.ne.s32.totalorder %s58, %s59
      %p73 = scmp.eq.s32.totalorder %s25, 1
      %p74 = por %p72, %p73
      %p76 = scmp.ne.s32.totalorder %s59, %s75
      %p77 = scmp.eq.s32.totalorder %s25, 0
      %p78 = por %p76, %p77
      %s80 = sadd.s32 %s79, 1
      %p83 = scmp.eq.s32.totalorder %s19, 1
      %p84 = scmp.ne.s32.totalorder %s79, %s81
      %p85 = scmp.eq.s32.totalorder %s19, 0
      %p86 = por %p84, %p85
      %p87 = scmp.ne.s32.totalorder %s79, %s81
      %p88 = scmp.eq.s32.totalorder %s24, 1
      %p89 = por %p87, %p88
      %p90 = scmp.ne.s32.totalorder %s81, %s82
      %p91 = scmp.eq.s32.totalorder %s24, 0
      %p92 = por %p90, %p91
      %p93 = scmp.ne.s32.totalorder %s81, %s82
      %p94 = scmp.eq.s32.totalorder %s25, 1
      %p95 = por %p93, %p94
      %p97 = scmp.ne.s32.totalorder %s82, %s96
      %p98 = scmp.eq.s32.totalorder %s25, 0
      %p99 = por %p97, %p98
      %s101 = sadd.s32 %s100, 1
      %p104 = scmp.eq.s32.totalorder %s19, 1
      %p105 = scmp.ne.s32.totalorder %s100, %s102
      %p106 = scmp.eq.s32.totalorder %s19, 0
      %p107 = por %p105, %p106
      %p108 = scmp.ne.s32.totalorder %s100, %s102
      %p109 = scmp.eq.s32.totalorder %s24, 1
      %p110 = por %p108, %p109
      %p111 = scmp.ne.s32.totalorder %s102, %s103
      %p112 = scmp.eq.s32.totalorder %s24, 0
      %p113 = por %p111, %p112
      %p114 = scmp.ne.s32.totalorder %s102, %s103
      %p115 = scmp.eq.s32.totalorder %s25, 1
      %p116 = por %p114, %p115
      %p118 = scmp.ne.s32.totalorder %s103, %s117
      %p119 = scmp.eq.s32.totalorder %s25, 0
      %p120 = por %p118, %p119
      %s122 = sadd.s32 %s121, 1
      %p125 = scmp.eq.s32.totalorder %s19, 1
      %p126 = scmp.ne.s32.totalorder %s121, %s123
      %p127 = scmp.eq.s32.totalorder %s19, 0
      %p128 = por %p126, %p127
      %p129 = scmp.ne.s32.totalorder %s121, %s123
      %p130 = scmp.eq.s32.totalorder %s24, 1
      %p131 = por %p129, %p130
      %p132 = scmp.ne.s32.totalorder %s123, %s124
      %p133 = scmp.eq.s32.totalorder %s24, 0
      %p134 = por %p132, %p133
      %p135 = scmp.ne.s32.totalorder %s123, %s124
      %p136 = scmp.eq.s32.totalorder %s25, 1
      %p137 = por %p135, %p136
      %p139 = scmp.ne.s32.totalorder %s124, %s138
      %p140 = scmp.eq.s32.totalorder %s25, 0
      %p141 = por %p139, %p140
      %s143 = sadd.s32 %s142, 1
      %p146 = scmp.eq.s32.totalorder %s19, 1
      %p147 = scmp.ne.s32.totalorder %s142, %s144
      %p148 = scmp.eq.s32.totalorder %s19, 0
      %p149 = por %p147, %p148
      %p150 = scmp.ne.s32.totalorder %s142, %s144
      %p151 = scmp.eq.s32.totalorder %s24, 1
      %p152 = por %p150, %p151
      %p153 = scmp.ne.s32.totalorder %s144, %s145
      %p154 = scmp.eq.s32.totalorder %s24, 0
      %p155 = por %p153, %p154
      %p156 = scmp.ne.s32.totalorder %s144, %s145
      %p157 = scmp.eq.s32.totalorder %s25, 1
      %p158 = por %p156, %p157
      %p160 = scmp.ne.s32.totalorder %s145, %s159
      %p161 = scmp.eq.s32.totalorder %s25, 0
      %p162 = por %p160, %p161
      %s164 = sadd.s32 %s163, 1
      %p167 = scmp.eq.s32.totalorder %s19, 1
      %p168 = scmp.ne.s32.totalorder %s163, %s165
      %p169 = scmp.eq.s32.totalorder %s19, 0
      %p170 = por %p168, %p169
      %p171 = scmp.ne.s32.totalorder %s163, %s165
      %p172 = scmp.eq.s32.totalorder %s24, 1
      %p173 = por %p171, %p172
      %p174 = scmp.ne.s32.totalorder %s165, %s166
      %p175 = scmp.eq.s32.totalorder %s24, 0
      %p176 = por %p174, %p175
      %p177 = scmp.ne.s32.totalorder %s165, %s166
      %p178 = scmp.eq.s32.totalorder %s25, 1
      %p179 = por %p177, %p178
      %p181 = scmp.ne.s32.totalorder %s166, %s180
      %p182 = scmp.eq.s32.totalorder %s25, 0
      %p183 = por %p181, %p182
      %s185 = sadd.s32 %s184, 1
      %p188 = scmp.eq.s32.totalorder %s19, 1
      %p189 = scmp.ne.s32.totalorder %s184, %s186
      %p190 = scmp.eq.s32.totalorder %s19, 0
      %p191 = por %p189, %p190
      %p192 = scmp.ne.s32.totalorder %s184, %s186
      %p193 = scmp.eq.s32.totalorder %s24, 1
      %p194 = por %p192, %p193
      %p195 = scmp.ne.s32.totalorder %s186, %s187
      %p196 = scmp.eq.s32.totalorder %s24, 0
      %p197 = por %p195, %p196
      %p198 = scmp.ne.s32.totalorder %s186, %s187
      %p199 = scmp.eq.s32.totalorder %s25, 1
      %p200 = por %p198, %p199
      %p202 = scmp.ne.s32.totalorder %s187, %s201
      %p203 = scmp.eq.s32.totalorder %s25, 0
      %p204 = por %p202, %p203
      %s206 = sadd.s32 %s205, 1
      %p209 = scmp.eq.s32.totalorder %s19, 1
      %p210 = scmp.ne.s32.totalorder %s205, %s207
      %p211 = scmp.eq.s32.totalorder %s19, 0
      %p212 = por %p210, %p211
      %p213 = scmp.ne.s32.totalorder %s205, %s207
      %p214 = scmp.eq.s32.totalorder %s24, 1
      %p215 = por %p213, %p214
      %p216 = scmp.ne.s32.totalorder %s207, %s208
      %p217 = scmp.eq.s32.totalorder %s24, 0
      %p218 = por %p216, %p217
      %p219 = scmp.ne.s32.totalorder %s207, %s208
      %p220 = scmp.eq.s32.totalorder %s25, 1
      %p221 = por %p219, %p220
      %p223 = scmp.ne.s32.totalorder %s208, %s222
      %p224 = scmp.eq.s32.totalorder %s25, 0
      %p225 = por %p223, %p224
      %s227 = sadd.s32 %s226, 1
      %p230 = scmp.eq.s32.totalorder %s19, 1
      %p231 = scmp.ne.s32.totalorder %s226, %s228
      %p232 = scmp.eq.s32.totalorder %s19, 0
      %p233 = por %p231, %p232
      %p234 = scmp.ne.s32.totalorder %s226, %s228
      %p235 = scmp.eq.s32.totalorder %s24, 1
      %p236 = por %p234, %p235
      %p237 = scmp.ne.s32.totalorder %s228, %s229
      %p238 = scmp.eq.s32.totalorder %s24, 0
      %p239 = por %p237, %p238
      %p240 = scmp.ne.s32.totalorder %s228, %s229
      %p241 = scmp.eq.s32.totalorder %s25, 1
      %p242 = por %p240, %p241
      %p244 = scmp.ne.s32.totalorder %s229, %s243
      %p245 = scmp.eq.s32.totalorder %s25, 0
      %p246 = por %p244, %p245
      %s248 = sadd.s32 %s247, 1
      %p251 = scmp.eq.s32.totalorder %s19, 1
      %p252 = scmp.ne.s32.totalorder %s247, %s249
      %p253 = scmp.eq.s32.totalorder %s19, 0
      %p254 = por %p252, %p253
      %p255 = scmp.ne.s32.totalorder %s247, %s249
      %p256 = scmp.eq.s32.totalorder %s24, 1
      %p257 = por %p255, %p256
      %p258 = scmp.ne.s32.totalorder %s249, %s250
      %p259 = scmp.eq.s32.totalorder %s24, 0
      %p260 = por %p258, %p259
      %p261 = scmp.ne.s32.totalorder %s249, %s250
      %p262 = scmp.eq.s32.totalorder %s25, 1
      %p263 = por %p261, %p262
      %p265 = scmp.ne.s32.totalorder %s250, %s264
      %p266 = scmp.eq.s32.totalorder %s25, 0
      %p267 = por %p265, %p266
      %s269 = sadd.s32 %s268, 1
      %p272 = scmp.eq.s32.totalorder %s19, 1
      %p273 = scmp.ne.s32.totalorder %s268, %s270
      %p274 = scmp.eq.s32.totalorder %s19, 0
      %p275 = por %p273, %p274
      %p276 = scmp.ne.s32.totalorder %s268, %s270
      %p277 = scmp.eq.s32.totalorder %s24, 1
      %p278 = por %p276, %p277
      %p279 = scmp.ne.s32.totalorder %s270, %s271
      %p280 = scmp.eq.s32.totalorder %s24, 0
      %p281 = por %p279, %p280
      %p282 = scmp.ne.s32.totalorder %s270, %s271
      %p283 = scmp.eq.s32.totalorder %s25, 1
      %p284 = por %p282, %p283
      %p286 = scmp.ne.s32.totalorder %s271, %s285
      %p287 = scmp.eq.s32.totalorder %s25, 0
      %p288 = por %p286, %p287
      %s290 = sadd.s32 %s289, 1
      %p293 = scmp.eq.s32.totalorder %s19, 1
      %p294 = scmp.ne.s32.totalorder %s289, %s291
      %p295 = scmp.eq.s32.totalorder %s19, 0
      %p296 = por %p294, %p295
      %p297 = scmp.ne.s32.totalorder %s289, %s291
      %p298 = scmp.eq.s32.totalorder %s24, 1
      %p299 = por %p297, %p298
      %p300 = scmp.ne.s32.totalorder %s291, %s292
      %p301 = scmp.eq.s32.totalorder %s24, 0
      %p302 = por %p300, %p301
      %p303 = scmp.ne.s32.totalorder %s291, %s292
      %p304 = scmp.eq.s32.totalorder %s25, 1
      %p305 = por %p303, %p304
      %p307 = scmp.ne.s32.totalorder %s292, %s306
      %p308 = scmp.eq.s32.totalorder %s25, 0
      %p309 = por %p307, %p308
      %s310 = ssub.s32 %s19, %s26
      %p311 = scmp.eq.s32.totalorder %s310, 0
      %s313 = sadd.s32 %s312, 1
      %s314 = scalar_select %p311, %s312, %s313
      %p317 = pneg %p311
      %p318 = scmp.eq.s32.totalorder %s19, 1
      %p319 = por %p317, %p318
      %p320 = scmp.ne.s32.totalorder %s312, %s315
      %p321 = scmp.eq.s32.totalorder %s19, 0
      %p322 = por %p320, %p321
      %p323 = scmp.ne.s32.totalorder %s312, %s315
      %p324 = scmp.eq.s32.totalorder %s24, 1
      %p325 = por %p323, %p324
      %p326 = scmp.ne.s32.totalorder %s315, %s316
      %p327 = scmp.eq.s32.totalorder %s24, 0
      %p328 = por %p326, %p327
      %p329 = scmp.ne.s32.totalorder %s315, %s316
      %p330 = scmp.eq.s32.totalorder %s25, 1
      %p331 = por %p329, %p330
      %p333 = scmp.ne.s32.totalorder %s316, %s332
      %p334 = scmp.eq.s32.totalorder %s25, 0
      %p335 = por %p333, %p334
      %p336 = scmp.le.s32.totalorder 1, %s19
      %p337 = scmp.lt.s32.totalorder %s19, 3
      %p338 = pnand %p336, %p337
      %p339 = pneg %p338
      // Predicated region
      $region9: #{conditional_vqvae_forward.1} parent=5 // pred_check
        _
      $region10: #{conditional_vqvae_forward.1} parent=5 // pred_check_branch
        %341 = sbr.rel (%p338) target = $region12
      $region11: #{conditional_vqvae_forward.1} parent=5 // pred_region
        %s342 = ssub.s32 %s19, 1
        // Predicated region
        $region13: #{conditional_vqvae_forward.1} parent=11 // pred_check
          %p343 = pneg %p92
        $region14: #{conditional_vqvae_forward.1} parent=11 // pred_check_branch
          %345 = sbr.rel (%p343) target = $region16
        $region15: #{conditional_vqvae_forward.1} parent=11 // pred_region
          _
        $region16: #{conditional_vqvae_forward.1} parent=11 // pred_fallthru
          _
        // Predicated region
        $region17: #{conditional_vqvae_forward.1} parent=11 // pred_check
          %p346 = pneg %p113
        $region18: #{conditional_vqvae_forward.1} parent=11 // pred_check_branch
          %348 = sbr.rel (%p346) target = $region20
        $region19: #{conditional_vqvae_forward.1} parent=11 // pred_region
          _
        $region20: #{conditional_vqvae_forward.1} parent=11 // pred_fallthru
          _
        // Predicated region
        $region21: #{conditional_vqvae_forward.1} parent=11 // pred_check
          %p349 = pneg %p134
        $region22: #{conditional_vqvae_forward.1} parent=11 // pred_check_branch
          %351 = sbr.rel (%p349) target = $region24
        $region23: #{conditional_vqvae_forward.1} parent=11 // pred_region
          _
        $region24: #{conditional_vqvae_forward.1} parent=11 // pred_fallthru
          _
        // Predicated region
        $region25: #{conditional_vqvae_forward.1} parent=11 // pred_check
          %p352 = pneg %p155
        $region26: #{conditional_vqvae_forward.1} parent=11 // pred_check_branch
          %354 = sbr.rel (%p352) target = $region28
        $region27: #{conditional_vqvae_forward.1} parent=11 // pred_region
          _
        $region28: #{conditional_vqvae_forward.1} parent=11 // pred_fallthru
          _
        // Predicated region
        $region29: #{conditional_vqvae_forward.1} parent=11 // pred_check
          %p355 = pneg %p176
        $region30: #{conditional_vqvae_forward.1} parent=11 // pred_check_branch
          %357 = sbr.rel (%p355) target = $region32
        $region31: #{conditional_vqvae_forward.1} parent=11 // pred_region
          _
        $region32: #{conditional_vqvae_forward.1} parent=11 // pred_fallthru
          _
        // Predicated region
        $region33: #{conditional_vqvae_forward.1} parent=11 // pred_check
          %p358 = pneg %p197
        $region34: #{conditional_vqvae_forward.1} parent=11 // pred_check_branch
          %360 = sbr.rel (%p358) target = $region36
        $region35: #{conditional_vqvae_forward.1} parent=11 // pred_region
          _
        $region36: #{conditional_vqvae_forward.1} parent=11 // pred_fallthru
          _
        // Predicated region
        $region37: #{conditional_vqvae_forward.1} parent=11 // pred_check
          %p361 = pneg %p218
        $region38: #{conditional_vqvae_forward.1} parent=11 // pred_check_branch
          %363 = sbr.rel (%p361) target = $region40
        $region39: #{conditional_vqvae_forward.1} parent=11 // pred_region
          _
        $region40: #{conditional_vqvae_forward.1} parent=11 // pred_fallthru
          _
        // Predicated region
        $region41: #{conditional_vqvae_forward.1} parent=11 // pred_check
          %p364 = pneg %p239
        $region42: #{conditional_vqvae_forward.1} parent=11 // pred_check_branch
          %366 = sbr.rel (%p364) target = $region44
        $region43: #{conditional_vqvae_forward.1} parent=11 // pred_region
          _
        $region44: #{conditional_vqvae_forward.1} parent=11 // pred_fallthru
          _
        // Predicated region
        $region45: #{conditional_vqvae_forward.1} parent=11 // pred_check
          %p367 = pneg %p260
        $region46: #{conditional_vqvae_forward.1} parent=11 // pred_check_branch
          %369 = sbr.rel (%p367) target = $region48
        $region47: #{conditional_vqvae_forward.1} parent=11 // pred_region
          _
        $region48: #{conditional_vqvae_forward.1} parent=11 // pred_fallthru
          _
        // Predicated region
        $region49: #{conditional_vqvae_forward.1} parent=11 // pred_check
          %p370 = pneg %p281
        $region50: #{conditional_vqvae_forward.1} parent=11 // pred_check_branch
          %372 = sbr.rel (%p370) target = $region52
        $region51: #{conditional_vqvae_forward.1} parent=11 // pred_region
          _
        $region52: #{conditional_vqvae_forward.1} parent=11 // pred_fallthru
          _
        // Predicated region
        $region53: #{conditional_vqvae_forward.1} parent=11 // pred_check
          %p373 = pneg %p302
        $region54: #{conditional_vqvae_forward.1} parent=11 // pred_check_branch
          %375 = sbr.rel (%p373) target = $region56
        $region55: #{conditional_vqvae_forward.1} parent=11 // pred_region
          _
        $region56: #{conditional_vqvae_forward.1} parent=11 // pred_fallthru
          _
      $region12: #{conditional_vqvae_forward.1} parent=5 // pred_fallthru
        _
      %p376 = scmp.lt.s32.totalorder %s19, 2
      // Predicated region
      $region57: #{conditional_vqvae_forward.1} parent=5 // pred_check
        %p377 = pneg %p376
      $region58: #{conditional_vqvae_forward.1} parent=5 // pred_check_branch
        %379 = sbr.rel (%p377) target = $region60
      $region59: #{conditional_vqvae_forward.1} parent=5 // pred_region
        // Predicated region
        $region61: #{conditional_vqvae_forward.1} parent=59 // pred_check
          %p380 = pneg %p39
        $region62: #{conditional_vqvae_forward.1} parent=59 // pred_check_branch
          %382 = sbr.rel (%p380) target = $region64
        $region63: #{conditional_vqvae_forward.1} parent=59 // pred_region
          %s383 = sand.u32 %s29, 1
          %s384 = sand.u32 %s29, 1
          %s385 = smul.addr %s384, 448
          %s386 = scalar_lea.vmem [#allocation2], %s385
          %s387 = smul.u32 4, %s19
          %s388 = smul.addr %s387, 8
          %s389 = scalar_lea.vmem %s0, %s388
          // Predicated region
          $region65: #{conditional_vqvae_forward.1} parent=63 // pred_check
            _
          $region66: #{conditional_vqvae_forward.1} parent=63 // pred_check_branch
            %391 = sbr.rel (0) target = $region68
          $region67: #{conditional_vqvae_forward.1} parent=63 // pred_region
            // Predicated region
            $region69: #{conditional_vqvae_forward.1} parent=67 // pred_check
              _
            $region70: #{conditional_vqvae_forward.1} parent=67 // pred_check_branch
              %393 = sbr.rel (0) target = $region72
            $region71: #{conditional_vqvae_forward.1} parent=67 // pred_region
              // Predicated region
              $region84: #{conditional_vqvae_forward.1} parent=71 // pred_check
                _
              $region85: #{conditional_vqvae_forward.1} parent=71 // pred_check_branch
                %518 = sbr.rel (0) target = $region87
              $region86: #{conditional_vqvae_forward.1} parent=71 // pred_region
                loop: start=0, step=1, limit=1
                $region88: #{conditional_vqvae_forward.1} parent=86 // loop_pre_header
                  _
                $region89: #{conditional_vqvae_forward.1} parent=86 // loop_header
                  %s520 = sphi 0, %s524
                  %p521 = scmp.ge.s32.totalorder %s520, 1
                  %s525 = sphi %s389, %s389
                  %s526 = sphi %s386, %s386
                $region90: #{conditional_vqvae_forward.1} parent=86 // loop_header_branch
                  %523 = sbr.rel (%p521) target = $region94
                $region91: #{conditional_vqvae_forward.1} parent=86 // loop_body
                  %v527 = vld [vmem:[%s525] sm:$0xff]
                  %528 = vst [vmem:[%s526] sm:$0xff] %v527
                  %v529 = vld [vmem:[%s525 + $0x8] sm:$0xff]
                  %530 = vst [vmem:[%s526 + $0x8] sm:$0xff] %v529
                  %v531 = vld [vmem:[%s525 + $0x10] sm:$0xff]
                  %532 = vst [vmem:[%s526 + $0x10] sm:$0xff] %v531
                  %v533 = vld [vmem:[%s525 + $0x18] sm:$0xff]
                  %534 = vst [vmem:[%s526 + $0x18] sm:$0xff] %v533
                  %v535 = vld [vmem:[%s525 + $0x40] sm:$0xff]
                  %536 = vst [vmem:[%s526 + $0x20] sm:$0xff] %v535
                  %v537 = vld [vmem:[%s525 + $0x48] sm:$0xff]
                  %538 = vst [vmem:[%s526 + $0x28] sm:$0xff] %v537
                  %v539 = vld [vmem:[%s525 + $0x50] sm:$0xff]
                  %540 = vst [vmem:[%s526 + $0x30] sm:$0xff] %v539
                  %v541 = vld [vmem:[%s525 + $0x58] sm:$0xff]
                  %542 = vst [vmem:[%s526 + $0x38] sm:$0xff] %v541
                  %v543 = vld [vmem:[%s525 + $0x80] sm:$0xff]
                  %544 = vst [vmem:[%s526 + $0x40] sm:$0xff] %v543
                  %v545 = vld [vmem:[%s525 + $0x88] sm:$0xff]
                  %546 = vst [vmem:[%s526 + $0x48] sm:$0xff] %v545
                  %v547 = vld [vmem:[%s525 + $0x90] sm:$0xff]
                  %548 = vst [vmem:[%s526 + $0x50] sm:$0xff] %v547
                  %v549 = vld [vmem:[%s525 + $0x98] sm:$0xff]
                  %550 = vst [vmem:[%s526 + $0x58] sm:$0xff] %v549
                  %v551 = vld [vmem:[%s525 + $0xc0] sm:$0xff]
                  %552 = vst [vmem:[%s526 + $0x60] sm:$0xff] %v551
                  %v553 = vld [vmem:[%s525 + $0xc8] sm:$0xff]
                  %554 = vst [vmem:[%s526 + $0x68] sm:$0xff] %v553
                  %v555 = vld [vmem:[%s525 + $0xd0] sm:$0xff]
                  %556 = vst [vmem:[%s526 + $0x70] sm:$0xff] %v555
                  %v557 = vld [vmem:[%s525 + $0xd8] sm:$0xff]
                  %558 = vst [vmem:[%s526 + $0x78] sm:$0xff] %v557
                  %v559 = vld [vmem:[%s525 + $0x100] sm:$0xff]
                  %560 = vst [vmem:[%s526 + $0x80] sm:$0xff] %v559
                  %v561 = vld [vmem:[%s525 + $0x108] sm:$0xff]
                  %562 = vst [vmem:[%s526 + $0x88] sm:$0xff] %v561
                  %v563 = vld [vmem:[%s525 + $0x110] sm:$0xff]
                  %564 = vst [vmem:[%s526 + $0x90] sm:$0xff] %v563
                  %v565 = vld [vmem:[%s525 + $0x118] sm:$0xff]
                  %566 = vst [vmem:[%s526 + $0x98] sm:$0xff] %v565
                  %v567 = vld [vmem:[%s525 + $0x140] sm:$0xff]
                  %568 = vst [vmem:[%s526 + $0xa0] sm:$0xff] %v567
                  %v569 = vld [vmem:[%s525 + $0x148] sm:$0xff]
                  %570 = vst [vmem:[%s526 + $0xa8] sm:$0xff] %v569
                  %v571 = vld [vmem:[%s525 + $0x150] sm:$0xff]
                  %572 = vst [vmem:[%s526 + $0xb0] sm:$0xff] %v571
                  %v573 = vld [vmem:[%s525 + $0x158] sm:$0xff]
                  %574 = vst [vmem:[%s526 + $0xb8] sm:$0xff] %v573
                  %v575 = vld [vmem:[%s525 + $0x180] sm:$0xff]
                  %576 = vst [vmem:[%s526 + $0xc0] sm:$0xff] %v575
                  %v577 = vld [vmem:[%s525 + $0x188] sm:$0xff]
                  %578 = vst [vmem:[%s526 + $0xc8] sm:$0xff] %v577
                  %v579 = vld [vmem:[%s525 + $0x190] sm:$0xff]
                  %580 = vst [vmem:[%s526 + $0xd0] sm:$0xff] %v579
                  %v581 = vld [vmem:[%s525 + $0x198] sm:$0xff]
                  %582 = vst [vmem:[%s526 + $0xd8] sm:$0xff] %v581
                  %v583 = vld [vmem:[%s525 + $0x1c0] sm:$0xff]
                  %584 = vst [vmem:[%s526 + $0xe0] sm:$0xff] %v583
                  %v585 = vld [vmem:[%s525 + $0x1c8] sm:$0xff]
                  %586 = vst [vmem:[%s526 + $0xe8] sm:$0xff] %v585
                  %v587 = vld [vmem:[%s525 + $0x1d0] sm:$0xff]
                  %588 = vst [vmem:[%s526 + $0xf0] sm:$0xff] %v587
                  %v589 = vld [vmem:[%s525 + $0x1d8] sm:$0xff]
                  %590 = vst [vmem:[%s526 + $0xf8] sm:$0xff] %v589
                  %v591 = vld [vmem:[%s525 + $0x200] sm:$0xff]
                  %592 = vst [vmem:[%s526 + $0x100] sm:$0xff] %v591
                  %v593 = vld [vmem:[%s525 + $0x208] sm:$0xff]
                  %594 = vst [vmem:[%s526 + $0x108] sm:$0xff] %v593
                  %v595 = vld [vmem:[%s525 + $0x210] sm:$0xff]
                  %596 = vst [vmem:[%s526 + $0x110] sm:$0xff] %v595
                  %v597 = vld [vmem:[%s525 + $0x218] sm:$0xff]
                  %598 = vst [vmem:[%s526 + $0x118] sm:$0xff] %v597
                  %v599 = vld [vmem:[%s525 + $0x240] sm:$0xff]
                  %600 = vst [vmem:[%s526 + $0x120] sm:$0xff] %v599
                  %v601 = vld [vmem:[%s525 + $0x248] sm:$0xff]
                  %602 = vst [vmem:[%s526 + $0x128] sm:$0xff] %v601
                  %v603 = vld [vmem:[%s525 + $0x250] sm:$0xff]
                  %604 = vst [vmem:[%s526 + $0x130] sm:$0xff] %v603
                  %v605 = vld [vmem:[%s525 + $0x258] sm:$0xff]
                  %606 = vst [vmem:[%s526 + $0x138] sm:$0xff] %v605
                  %v607 = vld [vmem:[%s525 + $0x280] sm:$0xff]
                  %608 = vst [vmem:[%s526 + $0x140] sm:$0xff] %v607
                  %v609 = vld [vmem:[%s525 + $0x288] sm:$0xff]
                  %610 = vst [vmem:[%s526 + $0x148] sm:$0xff] %v609
                  %v611 = vld [vmem:[%s525 + $0x290] sm:$0xff]
                  %612 = vst [vmem:[%s526 + $0x150] sm:$0xff] %v611
                  %v613 = vld [vmem:[%s525 + $0x298] sm:$0xff]
                  %614 = vst [vmem:[%s526 + $0x158] sm:$0xff] %v613
                  %v615 = vld [vmem:[%s525 + $0x2c0] sm:$0xff]
                  %616 = vst [vmem:[%s526 + $0x160] sm:$0xff] %v615
                  %v617 = vld [vmem:[%s525 + $0x2c8] sm:$0xff]
                  %618 = vst [vmem:[%s526 + $0x168] sm:$0xff] %v617
                  %v619 = vld [vmem:[%s525 + $0x2d0] sm:$0xff]
                  %620 = vst [vmem:[%s526 + $0x170] sm:$0xff] %v619
                  %v621 = vld [vmem:[%s525 + $0x2d8] sm:$0xff]
                  %622 = vst [vmem:[%s526 + $0x178] sm:$0xff] %v621
                  %v623 = vld [vmem:[%s525 + $0x300] sm:$0xff]
                  %624 = vst [vmem:[%s526 + $0x180] sm:$0xff] %v623
                  %v625 = vld [vmem:[%s525 + $0x308] sm:$0xff]
                  %626 = vst [vmem:[%s526 + $0x188] sm:$0xff] %v625
                  %v627 = vld [vmem:[%s525 + $0x310] sm:$0xff]
                  %628 = vst [vmem:[%s526 + $0x190] sm:$0xff] %v627
                  %v629 = vld [vmem:[%s525 + $0x318] sm:$0xff]
                  %630 = vst [vmem:[%s526 + $0x198] sm:$0xff] %v629
                  %v631 = vld [vmem:[%s525 + $0x340] sm:$0xff]
                  %632 = vst [vmem:[%s526 + $0x1a0] sm:$0xff] %v631
                  %v633 = vld [vmem:[%s525 + $0x348] sm:$0xff]
                  %634 = vst [vmem:[%s526 + $0x1a8] sm:$0xff] %v633
                  %v635 = vld [vmem:[%s525 + $0x350] sm:$0xff]
                  %636 = vst [vmem:[%s526 + $0x1b0] sm:$0xff] %v635
                  %v637 = vld [vmem:[%s525 + $0x358] sm:$0xff]
                  %638 = vst [vmem:[%s526 + $0x1b8] sm:$0xff] %v637
                $region92: #{conditional_vqvae_forward.1} parent=86 // loop_footer
                  %s524 = sadd.s32 1, %s520
                $region93: #{conditional_vqvae_forward.1} parent=86 // loop_footer_branch
                  %519 = sbr.rel target = $region89
                $region94: #{conditional_vqvae_forward.1} parent=86 // loop_exit
                  _
              $region87: #{conditional_vqvae_forward.1} parent=71 // pred_fallthru
                _
              // Predicated region
              $region95: #{conditional_vqvae_forward.1} parent=71 // pred_check
                _
              $region96: #{conditional_vqvae_forward.1} parent=71 // pred_check_branch
                %640 = sbr.rel target = $region98
              $region97: #{conditional_vqvae_forward.1} parent=71 // pred_region
                _
              $region98: #{conditional_vqvae_forward.1} parent=71 // pred_fallthru
                _
            $region72: #{conditional_vqvae_forward.1} parent=67 // pred_fallthru
              _
            // Predicated region
            $region73: #{conditional_vqvae_forward.1} parent=67 // pred_check
              _
            $region74: #{conditional_vqvae_forward.1} parent=67 // pred_check_branch
              %395 = sbr.rel target = $region76
            $region75: #{conditional_vqvae_forward.1} parent=67 // pred_region
              loop: start=0, step=1, limit=1
              $region77: #{conditional_vqvae_forward.1} parent=75 // loop_pre_header
                _
              $region78: #{conditional_vqvae_forward.1} parent=75 // loop_header
                %s398 = sphi 0, %s402
                %p399 = scmp.ge.s32.totalorder %s398, 1
                %s403 = sphi %s389, %s389
                %s404 = sphi %s386, %s386
              $region79: #{conditional_vqvae_forward.1} parent=75 // loop_header_branch
                %401 = sbr.rel (%p399) target = $region83
              $region80: #{conditional_vqvae_forward.1} parent=75 // loop_body
                %v405 = vld [vmem:[%s403] sm:$0xff]
                %406 = vst [vmem:[%s404] sm:$0xff] %v405
                %v407 = vld [vmem:[%s403 + $0x8] sm:$0xff]
                %408 = vst [vmem:[%s404 + $0x8] sm:$0xff] %v407
                %v409 = vld [vmem:[%s403 + $0x10] sm:$0xff]
                %410 = vst [vmem:[%s404 + $0x10] sm:$0xff] %v409
                %v411 = vld [vmem:[%s403 + $0x18] sm:$0xff]
                %412 = vst [vmem:[%s404 + $0x18] sm:$0xff] %v411
                %v413 = vld [vmem:[%s403 + $0x40] sm:$0xff]
                %414 = vst [vmem:[%s404 + $0x20] sm:$0xff] %v413
                %v415 = vld [vmem:[%s403 + $0x48] sm:$0xff]
                %416 = vst [vmem:[%s404 + $0x28] sm:$0xff] %v415
                %v417 = vld [vmem:[%s403 + $0x50] sm:$0xff]
                %418 = vst [vmem:[%s404 + $0x30] sm:$0xff] %v417
                %v419 = vld [vmem:[%s403 + $0x58] sm:$0xff]
                %420 = vst [vmem:[%s404 + $0x38] sm:$0xff] %v419
                %v421 = vld [vmem:[%s403 + $0x80] sm:$0xff]
                %422 = vst [vmem:[%s404 + $0x40] sm:$0xff] %v421
                %v423 = vld [vmem:[%s403 + $0x88] sm:$0xff]
                %424 = vst [vmem:[%s404 + $0x48] sm:$0xff] %v423
                %v425 = vld [vmem:[%s403 + $0x90] sm:$0xff]
                %426 = vst [vmem:[%s404 + $0x50] sm:$0xff] %v425
                %v427 = vld [vmem:[%s403 + $0x98] sm:$0xff]
                %428 = vst [vmem:[%s404 + $0x58] sm:$0xff] %v427
                %v429 = vld [vmem:[%s403 + $0xc0] sm:$0xff]
                %430 = vst [vmem:[%s404 + $0x60] sm:$0xff] %v429
                %v431 = vld [vmem:[%s403 + $0xc8] sm:$0xff]
                %432 = vst [vmem:[%s404 + $0x68] sm:$0xff] %v431
                %v433 = vld [vmem:[%s403 + $0xd0] sm:$0xff]
                %434 = vst [vmem:[%s404 + $0x70] sm:$0xff] %v433
                %v435 = vld [vmem:[%s403 + $0xd8] sm:$0xff]
                %436 = vst [vmem:[%s404 + $0x78] sm:$0xff] %v435
                %v437 = vld [vmem:[%s403 + $0x100] sm:$0xff]
                %438 = vst [vmem:[%s404 + $0x80] sm:$0xff] %v437
                %v439 = vld [vmem:[%s403 + $0x108] sm:$0xff]
                %440 = vst [vmem:[%s404 + $0x88] sm:$0xff] %v439
                %v441 = vld [vmem:[%s403 + $0x110] sm:$0xff]
                %442 = vst [vmem:[%s404 + $0x90] sm:$0xff] %v441
                %v443 = vld [vmem:[%s403 + $0x118] sm:$0xff]
                %444 = vst [vmem:[%s404 + $0x98] sm:$0xff] %v443
                %v445 = vld [vmem:[%s403 + $0x140] sm:$0xff]
                %446 = vst [vmem:[%s404 + $0xa0] sm:$0xff] %v445
                %v447 = vld [vmem:[%s403 + $0x148] sm:$0xff]
                %448 = vst [vmem:[%s404 + $0xa8] sm:$0xff] %v447
                %v449 = vld [vmem:[%s403 + $0x150] sm:$0xff]
                %450 = vst [vmem:[%s404 + $0xb0] sm:$0xff] %v449
                %v451 = vld [vmem:[%s403 + $0x158] sm:$0xff]
                %452 = vst [vmem:[%s404 + $0xb8] sm:$0xff] %v451
                %v453 = vld [vmem:[%s403 + $0x180] sm:$0xff]
                %454 = vst [vmem:[%s404 + $0xc0] sm:$0xff] %v453
                %v455 = vld [vmem:[%s403 + $0x188] sm:$0xff]
                %456 = vst [vmem:[%s404 + $0xc8] sm:$0xff] %v455
                %v457 = vld [vmem:[%s403 + $0x190] sm:$0xff]
                %458 = vst [vmem:[%s404 + $0xd0] sm:$0xff] %v457
                %v459 = vld [vmem:[%s403 + $0x198] sm:$0xff]
                %460 = vst [vmem:[%s404 + $0xd8] sm:$0xff] %v459
                %v461 = vld [vmem:[%s403 + $0x1c0] sm:$0xff]
                %462 = vst [vmem:[%s404 + $0xe0] sm:$0xff] %v461
                %v463 = vld [vmem:[%s403 + $0x1c8] sm:$0xff]
                %464 = vst [vmem:[%s404 + $0xe8] sm:$0xff] %v463
                %v465 = vld [vmem:[%s403 + $0x1d0] sm:$0xff]
                %466 = vst [vmem:[%s404 + $0xf0] sm:$0xff] %v465
                %v467 = vld [vmem:[%s403 + $0x1d8] sm:$0xff]
                %468 = vst [vmem:[%s404 + $0xf8] sm:$0xff] %v467
                %v469 = vld [vmem:[%s403 + $0x200] sm:$0xff]
                %470 = vst [vmem:[%s404 + $0x100] sm:$0xff] %v469
                %v471 = vld [vmem:[%s403 + $0x208] sm:$0xff]
                %472 = vst [vmem:[%s404 + $0x108] sm:$0xff] %v471
                %v473 = vld [vmem:[%s403 + $0x210] sm:$0xff]
                %474 = vst [vmem:[%s404 + $0x110] sm:$0xff] %v473
                %v475 = vld [vmem:[%s403 + $0x218] sm:$0xff]
                %476 = vst [vmem:[%s404 + $0x118] sm:$0xff] %v475
                %v477 = vld [vmem:[%s403 + $0x240] sm:$0xff]
                %478 = vst [vmem:[%s404 + $0x120] sm:$0xff] %v477
                %v479 = vld [vmem:[%s403 + $0x248] sm:$0xff]
                %480 = vst [vmem:[%s404 + $0x128] sm:$0xff] %v479
                %v481 = vld [vmem:[%s403 + $0x250] sm:$0xff]
                %482 = vst [vmem:[%s404 + $0x130] sm:$0xff] %v481
                %v483 = vld [vmem:[%s403 + $0x258] sm:$0xff]
                %484 = vst [vmem:[%s404 + $0x138] sm:$0xff] %v483
                %v485 = vld [vmem:[%s403 + $0x280] sm:$0xff]
                %486 = vst [vmem:[%s404 + $0x140] sm:$0xff] %v485
                %v487 = vld [vmem:[%s403 + $0x288] sm:$0xff]
                %488 = vst [vmem:[%s404 + $0x148] sm:$0xff] %v487
                %v489 = vld [vmem:[%s403 + $0x290] sm:$0xff]
                %490 = vst [vmem:[%s404 + $0x150] sm:$0xff] %v489
                %v491 = vld [vmem:[%s403 + $0x298] sm:$0xff]
                %492 = vst [vmem:[%s404 + $0x158] sm:$0xff] %v491
                %v493 = vld [vmem:[%s403 + $0x2c0] sm:$0xff]
                %494 = vst [vmem:[%s404 + $0x160] sm:$0xff] %v493
                %v495 = vld [vmem:[%s403 + $0x2c8] sm:$0xff]
                %496 = vst [vmem:[%s404 + $0x168] sm:$0xff] %v495
                %v497 = vld [vmem:[%s403 + $0x2d0] sm:$0xff]
                %498 = vst [vmem:[%s404 + $0x170] sm:$0xff] %v497
                %v499 = vld [vmem:[%s403 + $0x2d8] sm:$0xff]
                %500 = vst [vmem:[%s404 + $0x178] sm:$0xff] %v499
                %v501 = vld [vmem:[%s403 + $0x300] sm:$0xff]
                %502 = vst [vmem:[%s404 + $0x180] sm:$0xff] %v501
                %v503 = vld [vmem:[%s403 + $0x308] sm:$0xff]
                %504 = vst [vmem:[%s404 + $0x188] sm:$0xff] %v503
                %v505 = vld [vmem:[%s403 + $0x310] sm:$0xff]
                %506 = vst [vmem:[%s404 + $0x190] sm:$0xff] %v505
                %v507 = vld [vmem:[%s403 + $0x318] sm:$0xff]
                %508 = vst [vmem:[%s404 + $0x198] sm:$0xff] %v507
                %v509 = vld [vmem:[%s403 + $0x340] sm:$0xff]
                %510 = vst [vmem:[%s404 + $0x1a0] sm:$0xff] %v509
                %v511 = vld [vmem:[%s403 + $0x348] sm:$0xff]
                %512 = vst [vmem:[%s404 + $0x1a8] sm:$0xff] %v511
                %v513 = vld [vmem:[%s403 + $0x350] sm:$0xff]
                %514 = vst [vmem:[%s404 + $0x1b0] sm:$0xff] %v513
                %v515 = vld [vmem:[%s403 + $0x358] sm:$0xff]
                %516 = vst [vmem:[%s404 + $0x1b8] sm:$0xff] %v515
              $region81: #{conditional_vqvae_forward.1} parent=75 // loop_footer
                %s402 = sadd.s32 1, %s398
              $region82: #{conditional_vqvae_forward.1} parent=75 // loop_footer_branch
                %397 = sbr.rel target = $region78
              $region83: #{conditional_vqvae_forward.1} parent=75 // loop_exit
                _
            $region76: #{conditional_vqvae_forward.1} parent=67 // pred_fallthru
              _
          $region68: #{conditional_vqvae_forward.1} parent=63 // pred_fallthru
            _
          %641 = vnop
        $region64: #{conditional_vqvae_forward.1} parent=59 // pred_fallthru
          _
        // Predicated region
        $region99: #{conditional_vqvae_forward.1} parent=59 // pred_check
          %p642 = pneg %p65
        $region100: #{conditional_vqvae_forward.1} parent=59 // pred_check_branch
          %644 = sbr.rel (%p642) target = $region102
        $region101: #{conditional_vqvae_forward.1} parent=59 // pred_region
          %s645 = smul.u32 4, %s19
          %p646 = scmp.lt.s32.totalorder %s645, 7
          %s647 = scalar_select %p646, %s645, 7
          %s648 = smul.addr %s647, 8
          %s649 = scalar_lea.vmem %s1, %s648
          %s650 = smul.u32 4, %s19
        $region102: #{conditional_vqvae_forward.1} parent=59 // pred_fallthru
          _
      $region60: #{conditional_vqvae_forward.1} parent=5 // pred_fallthru
        _
      %p651 = scmp.le.s32.totalorder 1, %s19
      %p652 = scmp.lt.s32.totalorder %s19, 3
      %p653 = pnand %p651, %p652
      %p654 = pneg %p653
      // Predicated region
      $region103: #{conditional_vqvae_forward.1} parent=5 // pred_check
        _
      $region104: #{conditional_vqvae_forward.1} parent=5 // pred_check_branch
        %656 = sbr.rel (%p653) target = $region106
      $region105: #{conditional_vqvae_forward.1} parent=5 // pred_region
        %s657 = ssub.s32 %s19, 1
        %s658 = sand.u32 %s32, 1
        %s659 = sand.u32 %s32, 1
        %s660 = smul.addr %s659, 448
        %s661 = scalar_lea.vmem [#allocation2], %s660
        // Predicated region
        $region107: #{conditional_vqvae_forward.1} parent=105 // pred_check
          %p662 = pneg %p45
        $region108: #{conditional_vqvae_forward.1} parent=105 // pred_check_branch
          %664 = sbr.rel (%p662) target = $region110
        $region109: #{conditional_vqvae_forward.1} parent=105 // pred_region
          _
        $region110: #{conditional_vqvae_forward.1} parent=105 // pred_fallthru
          _
        %s665 = sand.u32 %s32, 1
        %s666 = sand.u32 %s32, 1
        %s667 = smul.addr %s666, 448
        %s668 = scalar_lea.vmem [#allocation2], %s667
        %p669 = pneg %p45
        %p670 = pneg %p42
        %s671 = smul.u32 4, %s24
        %p672 = scmp.lt.s32.totalorder %s671, 7
        %s673 = scalar_select %p672, %s671, 7
        %s674 = smul.addr %s673, 8
        %s675 = scalar_lea.vmem %s1, %s674
        %p676 = pneg %p71
        %p677 = pneg %p68
        %p678 = pneg %p92
        %p679 = pneg %p89
        %p680 = pneg %p113
        %p681 = pneg %p110
        %p682 = pneg %p134
        %p683 = pneg %p131
        %p684 = pneg %p155
        %p685 = pneg %p152
        %p686 = pneg %p176
        %p687 = pneg %p173
        %p688 = pneg %p197
        %p689 = pneg %p194
        %p690 = pneg %p218
        %p691 = pneg %p215
        %p692 = pneg %p239
        %p693 = pneg %p236
        %p694 = pneg %p260
        %p695 = pneg %p257
        %p696 = pneg %p281
        %p697 = pneg %p278
        %p698 = pneg %p302
        %p699 = pneg %p299
        %p700 = pneg %p328
        %p701 = pneg %p325
        %s702 = smul.u32 4, %s24
        %p703 = scmp.lt.s32.totalorder %s702, 7
        %s704 = scalar_select %p703, %s702, 7
        %s705 = smul.addr %s704, 8
        %s706 = scalar_lea.vmem %s13, %s705
        %s707 = smul.u32 4, %s24
        %s708 = smul.u32 4, %s24
        %p709 = scmp.lt.s32.totalorder %s708, 7
        %s710 = scalar_select %p709, %s708, 7
        %s711 = smul.addr %s710, 8
        %s712 = scalar_lea.vmem %s1, %s711
        %s713 = smul.u32 4, %s24
        %s714 = smul.u32 4, %s24
        %p715 = scmp.lt.s32.totalorder %s714, 7
        %s716 = scalar_select %p715, %s714, 7
        %s717 = smul.addr %s716, 8
        %s718 = scalar_lea.vmem %s13, %s717
        %s719 = smul.u32 4, %s24
        %v720 = vld [vmem:[%s661] sm:$0xff]
        %v721 = vld [vmem:[%s661 + $0x8] sm:$0xff]
        %v722 = vld [vmem:[%s661 + $0x10] sm:$0xff]
        %v723 = vld [vmem:[%s661 + $0x18] sm:$0xff]
        %v724 = vld [vmem:[%s661 + $0x20] sm:$0xff]
        %v725 = vld [vmem:[%s661 + $0x28] sm:$0xff]
        %v726 = vld [vmem:[%s661 + $0x30] sm:$0xff]
        %v727 = vld [vmem:[%s661 + $0x38] sm:$0xff]
        %v728 = vld [vmem:[%s661 + $0x40] sm:$0xff]
        %v729 = vld [vmem:[%s661 + $0x48] sm:$0xff]
        %v730 = vld [vmem:[%s661 + $0x50] sm:$0xff]
        %v731 = vld [vmem:[%s661 + $0x58] sm:$0xff]
        %v732 = vld [vmem:[%s661 + $0x60] sm:$0xff]
        %v733 = vld [vmem:[%s661 + $0x68] sm:$0xff]
        %v734 = vld [vmem:[%s661 + $0x70] sm:$0xff]
        %v735 = vld [vmem:[%s661 + $0x78] sm:$0xff]
        %v736 = vld [vmem:[%s661 + $0x80] sm:$0xff]
        %v737 = vld [vmem:[%s661 + $0x88] sm:$0xff]
        %v738 = vld [vmem:[%s661 + $0x90] sm:$0xff]
        %v739 = vld [vmem:[%s661 + $0x98] sm:$0xff]
        %v740 = vld [vmem:[%s661 + $0xa0] sm:$0xff]
        %v741 = vld [vmem:[%s661 + $0xa8] sm:$0xff]
        %v742 = vld [vmem:[%s661 + $0xb0] sm:$0xff]
        %v743 = vld [vmem:[%s661 + $0xb8] sm:$0xff]
        %v744 = vld [vmem:[%s661 + $0xc0] sm:$0xff]
        %v745 = vld [vmem:[%s661 + $0xc8] sm:$0xff]
        %v746 = vld [vmem:[%s661 + $0xd0] sm:$0xff]
        %v747 = vld [vmem:[%s661 + $0xd8] sm:$0xff]
        %v748 = vld [vmem:[%s661 + $0xe0] sm:$0xff]
        %v749 = vld [vmem:[%s661 + $0xe8] sm:$0xff]
        %v750 = vld [vmem:[%s661 + $0xf0] sm:$0xff]
        %v751 = vld [vmem:[%s661 + $0xf8] sm:$0xff]
        %v752 = vld [vmem:[%s661 + $0x100] sm:$0xff]
        %v753 = vld [vmem:[%s661 + $0x108] sm:$0xff]
        %v754 = vld [vmem:[%s661 + $0x110] sm:$0xff]
        %v755 = vld [vmem:[%s661 + $0x118] sm:$0xff]
        %v756 = vld [vmem:[%s661 + $0x120] sm:$0xff]
        %v757 = vld [vmem:[%s661 + $0x128] sm:$0xff]
        %v758 = vld [vmem:[%s661 + $0x130] sm:$0xff]
        %v759 = vld [vmem:[%s661 + $0x138] sm:$0xff]
        %v760 = vld [vmem:[%s661 + $0x140] sm:$0xff]
        %v761 = vld [vmem:[%s661 + $0x148] sm:$0xff]
        %v762 = vld [vmem:[%s661 + $0x150] sm:$0xff]
        %v763 = vld [vmem:[%s661 + $0x158] sm:$0xff]
        %v764 = vld [vmem:[%s661 + $0x160] sm:$0xff]
        %v765 = vld [vmem:[%s661 + $0x168] sm:$0xff]
        %v766 = vld [vmem:[%s661 + $0x170] sm:$0xff]
        %v767 = vld [vmem:[%s661 + $0x178] sm:$0xff]
        %v768 = vld [vmem:[%s661 + $0x180] sm:$0xff]
        %v769 = vld [vmem:[%s661 + $0x188] sm:$0xff]
        %v770 = vld [vmem:[%s661 + $0x190] sm:$0xff]
        %v771 = vld [vmem:[%s661 + $0x198] sm:$0xff]
        %v772 = vld [vmem:[%s661 + $0x1a0] sm:$0xff]
        %v773 = vld [vmem:[%s661 + $0x1a8] sm:$0xff]
        %v774 = vld [vmem:[%s661 + $0x1b0] sm:$0xff]
        %v775 = vld [vmem:[%s661 + $0x1b8] sm:$0xff]
        %v776 = vld [vmem:[%s2] sm:$0xff]
        %v777 = vld [vmem:[%s2 + $0x8] sm:$0x1]
        %vm778 = vcmask 72704
        %v780 = vsel %vm778, %v720, 0
        %v783 = vsel %vm778, %v721, 0
        %v786 = vsel %vm778, %v722, 0
        %v789 = vsel %vm778, %v723, 0
        %v792 = vsel %vm778, %v724, 0
        %v795 = vsel %vm778, %v725, 0
        %v798 = vsel %vm778, %v726, 0
        %v801 = vsel %vm778, %v727, 0
        %v804 = vsel %vm778, %v728, 0
        %v807 = vsel %vm778, %v729, 0
        %v810 = vsel %vm778, %v730, 0
        %v813 = vsel %vm778, %v731, 0
        %v816 = vsel %vm778, %v732, 0
        %v819 = vsel %vm778, %v733, 0
        %v822 = vsel %vm778, %v734, 0
        %v825 = vsel %vm778, %v735, 0
        %v828 = vsel %vm778, %v736, 0
        %v831 = vsel %vm778, %v737, 0
        %v834 = vsel %vm778, %v738, 0
        %v837 = vsel %vm778, %v739, 0
        %v840 = vsel %vm778, %v740, 0
        %v843 = vsel %vm778, %v741, 0
        %v846 = vsel %vm778, %v742, 0
        %v849 = vsel %vm778, %v743, 0
        %v852 = vsel %vm778, %v744, 0
        %v855 = vsel %vm778, %v745, 0
        %v858 = vsel %vm778, %v746, 0
        %v861 = vsel %vm778, %v747, 0
        %v864 = vsel %vm778, %v748, 0
        %v867 = vsel %vm778, %v749, 0
        %v870 = vsel %vm778, %v750, 0
        %v873 = vsel %vm778, %v751, 0
        %v876 = vsel %vm778, %v752, 0
        %v879 = vsel %vm778, %v753, 0
        %v882 = vsel %vm778, %v754, 0
        %v885 = vsel %vm778, %v755, 0
        %v888 = vsel %vm778, %v756, 0
        %v891 = vsel %vm778, %v757, 0
        %v894 = vsel %vm778, %v758, 0
        %v897 = vsel %vm778, %v759, 0
        %v900 = vsel %vm778, %v760, 0
        %v903 = vsel %vm778, %v761, 0
        %v906 = vsel %vm778, %v762, 0
        %v909 = vsel %vm778, %v763, 0
        %v912 = vsel %vm778, %v764, 0
        %v915 = vsel %vm778, %v765, 0
        %v918 = vsel %vm778, %v766, 0
        %v921 = vsel %vm778, %v767, 0
        %v924 = vsel %vm778, %v768, 0
        %v927 = vsel %vm778, %v769, 0
        %v930 = vsel %vm778, %v770, 0
        %v933 = vsel %vm778, %v771, 0
        %v936 = vsel %vm778, %v772, 0
        %v939 = vsel %vm778, %v773, 0
        %v942 = vsel %vm778, %v774, 0
        %v945 = vsel %vm778, %v775, 0
        %vm947 = vcmask 1040384
        %v949 = vsel %vm947, %v777, 0
        %951 = vmatprep.subr.mxu0 0.0
        %952 = vmatpush1.msra.mxu0 %v776
        %953 = vmatprep.subr.mxu0 0.0
        %954 = vmatpush1.msra.mxu0 %v949
        %955 = vmatprep.subr.mxu0 0.0
        %956 = vmatpush1.msra.mxu0 0.0
        %957 = vmatprep.subr.mxu0 0.0
        %958 = vmatpush1.msra.mxu0 0.0
        %959 = vmatprep.subr.mxu0 0.0
        %960 = vmatpush1.msra.mxu0 0.0
        %961 = vmatprep.subr.mxu0 0.0
        %962 = vmatpush1.msra.mxu0 0.0
        %963 = vmatprep.subr.mxu0 0.0
        %964 = vmatpush1.msra.mxu0 0.0
        %965 = vmatprep.subr.mxu0 0.0
        %966 = vmatpush1.msra.mxu0 0.0
        %967 = vmatprep.subr.mxu0 0.0
        %968 = vmatpush1.msra.mxu0 0.0
        %969 = vmatprep.subr.mxu0 0.0
        %970 = vmatpush1.msra.mxu0 0.0
        %971 = vmatprep.subr.mxu0 0.0
        %972 = vmatpush1.msra.mxu0 0.0
        %973 = vmatprep.subr.mxu0 0.0
        %974 = vmatpush1.msra.mxu0 0.0
        %975 = vmatprep.subr.mxu0 0.0
        %976 = vmatpush1.msra.mxu0 0.0
        %977 = vmatprep.subr.mxu0 0.0
        %978 = vmatpush1.msra.mxu0 0.0
        %979 = vmatprep.subr.mxu0 0.0
        %980 = vmatpush1.msra.mxu0 0.0
        %981 = vmatprep.subr.mxu0 0.0
        %982 = vmatpush1.msra.mxu0 0.0
        %983 = vmatprep.subr.mxu0 0.0
        %984 = vmatpush1.msra.mxu0 0.0
        %985 = vmatprep.subr.mxu0 0.0
        %986 = vmatpush1.msra.mxu0 0.0
        %987 = vmatprep.subr.mxu0 0.0
        %988 = vmatpush1.msra.mxu0 0.0
        %989 = vmatprep.subr.mxu0 0.0
        %990 = vmatpush1.msra.mxu0 0.0
        %991 = vmatprep.subr.mxu0 0.0
        %992 = vmatpush1.msra.mxu0 0.0
        %993 = vmatprep.subr.mxu0 0.0
        %994 = vmatpush1.msra.mxu0 0.0
        %995 = vmatprep.subr.mxu0 0.0
        %996 = vmatpush1.msra.mxu0 0.0
        %997 = vmatprep.subr.mxu0 0.0
        %998 = vmatpush1.msra.mxu0 0.0
        %999 = vmatprep.subr.mxu0 0.0
        %1000 = vmatpush1.msra.mxu0 0.0
        %1001 = vmatprep.subr.mxu0 0.0
        %1002 = vmatpush1.msra.mxu0 0.0
        %1003 = vmatprep.subr.mxu0 0.0
        %1004 = vmatpush1.msra.mxu0 0.0
        %1005 = vmatprep.subr.mxu0 0.0
        %1006 = vmatpush1.msra.mxu0 0.0
        %1007 = vmatprep.subr.mxu0 0.0
        %1008 = vmatpush1.msra.mxu0 0.0
        %1009 = vmatprep.subr.mxu0 0.0
        %1010 = vmatpush1.msra.mxu0 0.0
        %1011 = vmatprep.subr.mxu0 0.0
        %1012 = vmatpush1.msra.mxu0 0.0
        %1013 = vmatprep.subr.mxu0 0.0
        %1014 = vmatpush1.msra.mxu0 0.0
        %1015 = vmatprep.mubr.f32.mxu0 0.0
        %1016 = vmatmul.mubr.f32.gmra.mrb[0].mxu0 %v780
        %v1017 = vpop.f32.mrb[0].mxu0
        %v1018 = vadd.f32 0.0, %v1017
        %v1019 = vpop.f32.mrb[0].mxu0
        %1020 = vmatprep.mubr.f32.mxu0 0.0
        %1021 = vmatmul.mubr.f32.gmra.mrb[0].mxu0 %v783
        %v1022 = vpop.f32.mrb[0].mxu0
        %v1023 = vadd.f32 0.0, %v1022
        %v1024 = vpop.f32.mrb[0].mxu0
        %1025 = vmatprep.mubr.f32.mxu0 0.0
        %1026 = vmatmul.mubr.f32.gmra.mrb[0].mxu0 %v786
        %v1027 = vpop.f32.mrb[0].mxu0
        %v1028 = vadd.f32 0.0, %v1027
        %v1029 = vpop.f32.mrb[0].mxu0
        %1030 = vmatprep.mubr.f32.mxu0 0.0
        %1031 = vmatmul.mubr.f32.gmra.mrb[0].mxu0 %v789
        %v1032 = vpop.f32.mrb[0].mxu0
        %v1033 = vadd.f32 0.0, %v1032
        %v1034 = vpop.f32.mrb[0].mxu0
        %1035 = vmatprep.mubr.f32.mxu0 0.0
        %1036 = vmatmul.mubr.f32.gmra.mrb[0].mxu0 %v792
        %v1037 = vpop.f32.mrb[0].mxu0
        %v1038 = vadd.f32 0.0, %v1037
        %v1039 = vpop.f32.mrb[0].mxu0
        %1040 = vmatprep.mubr.f32.mxu0 0.0
        %1041 = vmatmul.mubr.f32.gmra.mrb[0].mxu0 %v795
        %v1042 = vpop.f32.mrb[0].mxu0
        %v1043 = vadd.f32 0.0, %v1042
        %v1044 = vpop.f32.mrb[0].mxu0
        %1045 = vmatprep.mubr.f32.mxu0 0.0
        %1046 = vmatmul.mubr.f32.gmra.mrb[0].mxu0 %v798
        %v1047 = vpop.f32.mrb[0].mxu0
        %v1048 = vadd.f32 0.0, %v1047
        %v1049 = vpop.f32.mrb[0].mxu0
        %1050 = vmatprep.mubr.f32.mxu0 0.0
        %1051 = vmatmul.mubr.f32.gmra.mrb[0].mxu0 %v801
        %v1052 = vpop.f32.mrb[0].mxu0
        %v1053 = vadd.f32 0.0, %v1052
        %v1054 = vpop.f32.mrb[0].mxu0
        %1055 = vmatprep.mubr.f32.mxu0 0.0
        %1056 = vmatmul.mubr.f32.gmra.mrb[0].mxu0 %v804
        %v1057 = vpop.f32.mrb[0].mxu0
        %v1058 = vadd.f32 0.0, %v1057
        %v1059 = vpop.f32.mrb[0].mxu0
        %1060 = vmatprep.mubr.f32.mxu0 0.0
        %1061 = vmatmul.mubr.f32.gmra.mrb[0].mxu0 %v807
        %v1062 = vpop.f32.mrb[0].mxu0
        %v1063 = vadd.f32 0.0, %v1062
        %v1064 = vpop.f32.mrb[0].mxu0
        %1065 = vmatprep.mubr.f32.mxu0 0.0
        %1066 = vmatmul.mubr.f32.gmra.mrb[0].mxu0 %v810
        %v1067 = vpop.f32.mrb[0].mxu0
        %v1068 = vadd.f32 0.0, %v1067
        %v1069 = vpop.f32.mrb[0].mxu0
        %1070 = vmatprep.mubr.f32.mxu0 0.0
        %1071 = vmatmul.mubr.f32.gmra.mrb[0].mxu0 %v813
        %v1072 = vpop.f32.mrb[0].mxu0
        %v1073 = vadd.f32 0.0, %v1072
        %v1074 = vpop.f32.mrb[0].mxu0
        %1075 = vmatprep.mubr.f32.mxu0 0.0
        %1076 = vmatmul.mubr.f32.gmra.mrb[0].mxu0 %v816
        %v1077 = vpop.f32.mrb[0].mxu0
        %v1078 = vadd.f32 0.0, %v1077
        %v1079 = vpop.f32.mrb[0].mxu0
        %1080 = vmatprep.mubr.f32.mxu0 0.0
        %1081 = vmatmul.mubr.f32.gmra.mrb[0].mxu0 %v819
        %v1082 = vpop.f32.mrb[0].mxu0
        %v1083 = vadd.f32 0.0, %v1082
        %v1084 = vpop.f32.mrb[0].mxu0
        %1085 = vmatprep.mubr.f32.mxu0 0.0
        %1086 = vmatmul.mubr.f32.gmra.mrb[0].mxu0 %v822
        %v1087 = vpop.f32.mrb[0].mxu0
        %v1088 = vadd.f32 0.0, %v1087
        %v1089 = vpop.f32.mrb[0].mxu0
        %1090 = vmatprep.mubr.f32.mxu0 0.0
        %1091 = vmatmul.mubr.f32.gmra.mrb[0].mxu0 %v825
        %v1092 = vpop.f32.mrb[0].mxu0
        %v1093 = vadd.f32 0.0, %v1092
        %v1094 = vpop.f32.mrb[0].mxu0
        %1095 = vmatprep.mubr.f32.mxu0 0.0
        %1096 = vmatmul.mubr.f32.gmra.mrb[0].mxu0 %v828
        %v1097 = vpop.f32.mrb[0].mxu0
        %v1098 = vadd.f32 0.0, %v1097
        %v1099 = vpop.f32.mrb[0].mxu0
        %1100 = vmatprep.mubr.f32.mxu0 0.0
        %1101 = vmatmul.mubr.f32.gmra.mrb[0].mxu0 %v831
        %v1102 = vpop.f32.mrb[0].mxu0
        %v1103 = vadd.f32 0.0, %v1102
        %v1104 = vpop.f32.mrb[0].mxu0
        %1105 = vmatprep.mubr.f32.mxu0 0.0
        %1106 = vmatmul.mubr.f32.gmra.mrb[0].mxu0 %v834
        %v1107 = vpop.f32.mrb[0].mxu0
        %v1108 = vadd.f32 0.0, %v1107
        %v1109 = vpop.f32.mrb[0].mxu0
        %1110 = vmatprep.mubr.f32.mxu0 0.0
        %1111 = vmatmul.mubr.f32.gmra.mrb[0].mxu0 %v837
        %v1112 = vpop.f32.mrb[0].mxu0
        %v1113 = vadd.f32 0.0, %v1112
        %v1114 = vpop.f32.mrb[0].mxu0
        %1115 = vmatprep.mubr.f32.mxu0 0.0
        %1116 = vmatmul.mubr.f32.gmra.mrb[0].mxu0 %v840
        %v1117 = vpop.f32.mrb[0].mxu0
        %v1118 = vadd.f32 0.0, %v1117
        %v1119 = vpop.f32.mrb[0].mxu0
        %1120 = vmatprep.mubr.f32.mxu0 0.0
        %1121 = vmatmul.mubr.f32.gmra.mrb[0].mxu0 %v843
        %v1122 = vpop.f32.mrb[0].mxu0
        %v1123 = vadd.f32 0.0, %v1122
        %v1124 = vpop.f32.mrb[0].mxu0
        %1125 = vmatprep.mubr.f32.mxu0 0.0
        %1126 = vmatmul.mubr.f32.gmra.mrb[0].mxu0 %v846
        %v1127 = vpop.f32.mrb[0].mxu0
        %v1128 = vadd.f32 0.0, %v1127
        %v1129 = vpop.f32.mrb[0].mxu0
        %1130 = vmatprep.mubr.f32.mxu0 0.0
        %1131 = vmatmul.mubr.f32.gmra.mrb[0].mxu0 %v849
        %v1132 = vpop.f32.mrb[0].mxu0
        %v1133 = vadd.f32 0.0, %v1132
        %v1134 = vpop.f32.mrb[0].mxu0
        %1135 = vmatprep.mubr.f32.mxu0 0.0
        %1136 = vmatmul.mubr.f32.gmra.mrb[0].mxu0 %v852
        %v1137 = vpop.f32.mrb[0].mxu0
        %v1138 = vadd.f32 0.0, %v1137
        %v1139 = vpop.f32.mrb[0].mxu0
        %1140 = vmatprep.mubr.f32.mxu0 0.0
        %1141 = vmatmul.mubr.f32.gmra.mrb[0].mxu0 %v855
        %v1142 = vpop.f32.mrb[0].mxu0
        %v1143 = vadd.f32 0.0, %v1142
        %v1144 = vpop.f32.mrb[0].mxu0
        %1145 = vmatprep.mubr.f32.mxu0 0.0
        %1146 = vmatmul.mubr.f32.gmra.mrb[0].mxu0 %v858
        %v1147 = vpop.f32.mrb[0].mxu0
        %v1148 = vadd.f32 0.0, %v1147
        %v1149 = vpop.f32.mrb[0].mxu0
        %1150 = vmatprep.mubr.f32.mxu0 0.0
        %1151 = vmatmul.mubr.f32.gmra.mrb[0].mxu0 %v861
        %v1152 = vpop.f32.mrb[0].mxu0
        %v1153 = vadd.f32 0.0, %v1152
        %v1154 = vpop.f32.mrb[0].mxu0
        %1155 = vmatprep.mubr.f32.mxu0 0.0
        %1156 = vmatmul.mubr.f32.gmra.mrb[0].mxu0 %v864
        %v1157 = vpop.f32.mrb[0].mxu0
        %v1158 = vadd.f32 0.0, %v1157
        %v1159 = vpop.f32.mrb[0].mxu0
        %1160 = vmatprep.mubr.f32.mxu0 0.0
        %1161 = vmatmul.mubr.f32.gmra.mrb[0].mxu0 %v867
        %v1162 = vpop.f32.mrb[0].mxu0
        %v1163 = vadd.f32 0.0, %v1162
        %v1164 = vpop.f32.mrb[0].mxu0
        %1165 = vmatprep.mubr.f32.mxu0 0.0
        %1166 = vmatmul.mubr.f32.gmra.mrb[0].mxu0 %v870
        %v1167 = vpop.f32.mrb[0].mxu0
        %v1168 = vadd.f32 0.0, %v1167
        %v1169 = vpop.f32.mrb[0].mxu0
        %1170 = vmatprep.mubr.f32.mxu0 0.0
        %1171 = vmatmul.mubr.f32.gmra.mrb[0].mxu0 %v873
        %v1172 = vpop.f32.mrb[0].mxu0
        %v1173 = vadd.f32 0.0, %v1172
        %v1174 = vpop.f32.mrb[0].mxu0
        %1175 = vmatprep.mubr.f32.mxu0 0.0
        %1176 = vmatmul.mubr.f32.gmra.mrb[0].mxu0 %v876
        %v1177 = vpop.f32.mrb[0].mxu0
        %v1178 = vadd.f32 0.0, %v1177
        %v1179 = vpop.f32.mrb[0].mxu0
        %1180 = vmatprep.mubr.f32.mxu0 0.0
        %1181 = vmatmul.mubr.f32.gmra.mrb[0].mxu0 %v879
        %v1182 = vpop.f32.mrb[0].mxu0
        %v1183 = vadd.f32 0.0, %v1182
        %v1184 = vpop.f32.mrb[0].mxu0
        %1185 = vmatprep.mubr.f32.mxu0 0.0
        %1186 = vmatmul.mubr.f32.gmra.mrb[0].mxu0 %v882
        %v1187 = vpop.f32.mrb[0].mxu0
        %v1188 = vadd.f32 0.0, %v1187
        %v1189 = vpop.f32.mrb[0].mxu0
        %1190 = vmatprep.mubr.f32.mxu0 0.0
        %1191 = vmatmul.mubr.f32.gmra.mrb[0].mxu0 %v885
        %v1192 = vpop.f32.mrb[0].mxu0
        %v1193 = vadd.f32 0.0, %v1192
        %v1194 = vpop.f32.mrb[0].mxu0
        %1195 = vmatprep.mubr.f32.mxu0 0.0
        %1196 = vmatmul.mubr.f32.gmra.mrb[0].mxu0 %v888
        %v1197 = vpop.f32.mrb[0].mxu0
        %v1198 = vadd.f32 0.0, %v1197
        %v1199 = vpop.f32.mrb[0].mxu0
        %1200 = vmatprep.mubr.f32.mxu0 0.0
        %1201 = vmatmul.mubr.f32.gmra.mrb[0].mxu0 %v891
        %v1202 = vpop.f32.mrb[0].mxu0
        %v1203 = vadd.f32 0.0, %v1202
        %v1204 = vpop.f32.mrb[0].mxu0
        %1205 = vmatprep.mubr.f32.mxu0 0.0
        %1206 = vmatmul.mubr.f32.gmra.mrb[0].mxu0 %v894
        %v1207 = vpop.f32.mrb[0].mxu0
        %v1208 = vadd.f32 0.0, %v1207
        %v1209 = vpop.f32.mrb[0].mxu0
        %1210 = vmatprep.mubr.f32.mxu0 0.0
        %1211 = vmatmul.mubr.f32.gmra.mrb[0].mxu0 %v897
        %v1212 = vpop.f32.mrb[0].mxu0
        %v1213 = vadd.f32 0.0, %v1212
        %v1214 = vpop.f32.mrb[0].mxu0
        %1215 = vmatprep.mubr.f32.mxu0 0.0
        %1216 = vmatmul.mubr.f32.gmra.mrb[0].mxu0 %v900
        %v1217 = vpop.f32.mrb[0].mxu0
        %v1218 = vadd.f32 0.0, %v1217
        %v1219 = vpop.f32.mrb[0].mxu0
        %1220 = vmatprep.mubr.f32.mxu0 0.0
        %1221 = vmatmul.mubr.f32.gmra.mrb[0].mxu0 %v903
        %v1222 = vpop.f32.mrb[0].mxu0
        %v1223 = vadd.f32 0.0, %v1222
        %v1224 = vpop.f32.mrb[0].mxu0
        %1225 = vmatprep.mubr.f32.mxu0 0.0
        %1226 = vmatmul.mubr.f32.gmra.mrb[0].mxu0 %v906
        %v1227 = vpop.f32.mrb[0].mxu0
        %v1228 = vadd.f32 0.0, %v1227
        %v1229 = vpop.f32.mrb[0].mxu0
        %1230 = vmatprep.mubr.f32.mxu0 0.0
        %1231 = vmatmul.mubr.f32.gmra.mrb[0].mxu0 %v909
        %v1232 = vpop.f32.mrb[0].mxu0
        %v1233 = vadd.f32 0.0, %v1232
        %v1234 = vpop.f32.mrb[0].mxu0
        %1235 = vmatprep.mubr.f32.mxu0 0.0
        %1236 = vmatmul.mubr.f32.gmra.mrb[0].mxu0 %v912
        %v1237 = vpop.f32.mrb[0].mxu0
        %v1238 = vadd.f32 0.0, %v1237
        %v1239 = vpop.f32.mrb[0].mxu0
        %1240 = vmatprep.mubr.f32.mxu0 0.0
        %1241 = vmatmul.mubr.f32.gmra.mrb[0].mxu0 %v915
        %v1242 = vpop.f32.mrb[0].mxu0
        %v1243 = vadd.f32 0.0, %v1242
        %v1244 = vpop.f32.mrb[0].mxu0
        %1245 = vmatprep.mubr.f32.mxu0 0.0
        %1246 = vmatmul.mubr.f32.gmra.mrb[0].mxu0 %v918
        %v1247 = vpop.f32.mrb[0].mxu0
        %v1248 = vadd.f32 0.0, %v1247
        %v1249 = vpop.f32.mrb[0].mxu0
        %1250 = vmatprep.mubr.f32.mxu0 0.0
        %1251 = vmatmul.mubr.f32.gmra.mrb[0].mxu0 %v921
        %v1252 = vpop.f32.mrb[0].mxu0
        %v1253 = vadd.f32 0.0, %v1252
        %v1254 = vpop.f32.mrb[0].mxu0
        %1255 = vmatprep.mubr.f32.mxu0 0.0
        %1256 = vmatmul.mubr.f32.gmra.mrb[0].mxu0 %v924
        %v1257 = vpop.f32.mrb[0].mxu0
        %v1258 = vadd.f32 0.0, %v1257
        %v1259 = vpop.f32.mrb[0].mxu0
        %1260 = vmatprep.mubr.f32.mxu0 0.0
        %1261 = vmatmul.mubr.f32.gmra.mrb[0].mxu0 %v927
        %v1262 = vpop.f32.mrb[0].mxu0
        %v1263 = vadd.f32 0.0, %v1262
        %v1264 = vpop.f32.mrb[0].mxu0
        %1265 = vmatprep.mubr.f32.mxu0 0.0
        %1266 = vmatmul.mubr.f32.gmra.mrb[0].mxu0 %v930
        %v1267 = vpop.f32.mrb[0].mxu0
        %v1268 = vadd.f32 0.0, %v1267
        %v1269 = vpop.f32.mrb[0].mxu0
        %1270 = vmatprep.mubr.f32.mxu0 0.0
        %1271 = vmatmul.mubr.f32.gmra.mrb[0].mxu0 %v933
        %v1272 = vpop.f32.mrb[0].mxu0
        %v1273 = vadd.f32 0.0, %v1272
        %v1274 = vpop.f32.mrb[0].mxu0
        %1275 = vmatprep.mubr.f32.mxu0 0.0
        %1276 = vmatmul.mubr.f32.gmra.mrb[0].mxu0 %v936
        %v1277 = vpop.f32.mrb[0].mxu0
        %v1278 = vadd.f32 0.0, %v1277
        %v1279 = vpop.f32.mrb[0].mxu0
        %1280 = vmatprep.mubr.f32.mxu0 0.0
        %1281 = vmatmul.mubr.f32.gmra.mrb[0].mxu0 %v939
        %v1282 = vpop.f32.mrb[0].mxu0
        %v1283 = vadd.f32 0.0, %v1282
        %v1284 = vpop.f32.mrb[0].mxu0
        %1285 = vmatprep.mubr.f32.mxu0 0.0
        %1286 = vmatmul.mubr.f32.gmra.mrb[0].mxu0 %v942
        %v1287 = vpop.f32.mrb[0].mxu0
        %v1288 = vadd.f32 0.0, %v1287
        %v1289 = vpop.f32.mrb[0].mxu0
        %1290 = vmatprep.mubr.f32.mxu0 0.0
        %1291 = vmatmul.mubr.f32.gmra.mrb[0].mxu0 %v945
        %v1292 = vpop.f32.mrb[0].mxu0
        %v1293 = vadd.f32 0.0, %v1292
        %v1294 = vpop.f32.mrb[0].mxu0
        %1295 = vdwg.mxu0
        %v1296 = vmax.f32 %v1018, %v1038
        %v1297 = vmax.f32 %v1023, %v1043
        %v1298 = vmax.f32 %v1028, %v1048
        %v1299 = vmax.f32 %v1033, %v1053
        %v1300 = vmax.f32 %v1058, %v1078
        %v1301 = vmax.f32 %v1063, %v1083
        %v1302 = vmax.f32 %v1068, %v1088
        %v1303 = vmax.f32 %v1073, %v1093
        %v1304 = vmax.f32 %v1098, %v1118
        %v1305 = vmax.f32 %v1103, %v1123
        %v1306 = vmax.f32 %v1108, %v1128
        %v1307 = vmax.f32 %v1113, %v1133
        %v1308 = vmax.f32 %v1138, %v1158
        %v1309 = vmax.f32 %v1143, %v1163
        %v1310 = vmax.f32 %v1148, %v1168
        %v1311 = vmax.f32 %v1153, %v1173
        %v1312 = vmax.f32 %v1178, %v1198
        %v1313 = vmax.f32 %v1183, %v1203
        %v1314 = vmax.f32 %v1188, %v1208
        %v1315 = vmax.f32 %v1193, %v1213
        %v1316 = vmax.f32 %v1218, %v1238
        %v1317 = vmax.f32 %v1223, %v1243
        %v1318 = vmax.f32 %v1228, %v1248
        %v1319 = vmax.f32 %v1233, %v1253
        %v1320 = vmax.f32 %v1258, %v1278
        %v1321 = vmax.f32 %v1263, %v1283
        %v1322 = vmax.f32 %v1268, %v1288
        %v1323 = vmax.f32 %v1273, %v1293
        %v1324 = vmax.f32 %v1296, %v1300
        %v1325 = vmax.f32 %v1297, %v1301
        %v1326 = vmax.f32 %v1298, %v1302
        %v1327 = vmax.f32 %v1299, %v1303
        %v1328 = vmax.f32 %v1304, %v1308
        %v1329 = vmax.f32 %v1305, %v1309
        %v1330 = vmax.f32 %v1306, %v1310
        %v1331 = vmax.f32 %v1307, %v1311
        %v1332 = vmax.f32 %v1312, %v1316
        %v1333 = vmax.f32 %v1313, %v1317
        %v1334 = vmax.f32 %v1314, %v1318
        %v1335 = vmax.f32 %v1315, %v1319
        %v1336 = vmax.f32 %v1324, %v1328
        %v1337 = vmax.f32 %v1325, %v1329
        %v1338 = vmax.f32 %v1326, %v1330
        %v1339 = vmax.f32 %v1327, %v1331
        %v1340 = vmax.f32 %v1332, %v1320
        %v1341 = vmax.f32 %v1333, %v1321
        %v1342 = vmax.f32 %v1334, %v1322
        %v1343 = vmax.f32 %v1335, %v1323
        %v1344 = vmax.f32 %v1336, %v1340
        %v1345 = vmax.f32 %v1337, %v1341
        %v1346 = vmax.f32 %v1338, %v1342
        %v1347 = vmax.f32 %v1339, %v1343
        %v1348 = vld [vmem:[%s3] sm:$0xff]
        %v1349 = vld [vmem:[%s3 + $0x8] sm:$0xff]
        %v1350 = vld [vmem:[%s3 + $0x10] sm:$0xff]
        %v1351 = vld [vmem:[%s3 + $0x18] sm:$0xff]
        %v1352 = vld [vmem:[%s4] sm:$0x1]
        %v1354 = vlaneseq
        %v1355 = vshrl.u32 %v1354, 7
        %v1356 = vsub.s32 0, %v1355
        %v1357 = vrot.slane %v1352, %v1356
        %vm1359 = vcmask 261120
        %v1361 = vsel %vm1359, %v1344, 0
        %v1364 = vsel %vm1359, %v1345, 0
        %v1367 = vsel %vm1359, %v1346, 0
        %v1370 = vsel %vm1359, %v1347, 0
        %1372 = vmatprep.subr.mxu0 0.0
        %1373 = vmatpush1.msra.mxu0 %v1348
        %1374 = vmatprep.subr.mxu0 0.0
        %1375 = vmatpush1.msra.mxu0 %v1349
        %1376 = vmatprep.subr.mxu0 0.0
        %1377 = vmatpush1.msra.mxu0 %v1350
        %1378 = vmatprep.subr.mxu0 0.0
        %1379 = vmatpush1.msra.mxu0 %v1351
        %1380 = vmatprep.subr.mxu0 0.0
        %1381 = vmatpush1.msra.mxu0 0.0
        %1382 = vmatprep.subr.mxu0 0.0
        %1383 = vmatpush1.msra.mxu0 0.0
        %1384 = vmatprep.subr.mxu0 0.0
        %1385 = vmatpush1.msra.mxu0 0.0
        %1386 = vmatprep.subr.mxu0 0.0
        %1387 = vmatpush1.msra.mxu0 0.0
        %1388 = vmatprep.subr.mxu0 0.0
        %1389 = vmatpush1.msra.mxu0 0.0
        %1390 = vmatprep.subr.mxu0 0.0
        %1391 = vmatpush1.msra.mxu0 0.0
        %1392 = vmatprep.subr.mxu0 0.0
        %1393 = vmatpush1.msra.mxu0 0.0
        %1394 = vmatprep.subr.mxu0 0.0
        %1395 = vmatpush1.msra.mxu0 0.0
        %1396 = vmatprep.subr.mxu0 0.0
        %1397 = vmatpush1.msra.mxu0 0.0
        %1398 = vmatprep.subr.mxu0 0.0
        %1399 = vmatpush1.msra.mxu0 0.0
        %1400 = vmatprep.subr.mxu0 0.0
        %1401 = vmatpush1.msra.mxu0 0.0
        %1402 = vmatprep.subr.mxu0 0.0
        %1403 = vmatpush1.msra.mxu0 0.0
        %1404 = vmatprep.subr.mxu0 0.0
        %1405 = vmatpush1.msra.mxu0 0.0
        %1406 = vmatprep.subr.mxu0 0.0
        %1407 = vmatpush1.msra.mxu0 0.0
        %1408 = vmatprep.subr.mxu0 0.0
        %1409 = vmatpush1.msra.mxu0 0.0
        %1410 = vmatprep.subr.mxu0 0.0
        %1411 = vmatpush1.msra.mxu0 0.0
        %1412 = vmatprep.subr.mxu0 0.0
        %1413 = vmatpush1.msra.mxu0 0.0
        %1414 = vmatprep.subr.mxu0 0.0
        %1415 = vmatpush1.msra.mxu0 0.0
        %1416 = vmatprep.subr.mxu0 0.0
        %1417 = vmatpush1.msra.mxu0 0.0
        %1418 = vmatprep.subr.mxu0 0.0
        %1419 = vmatpush1.msra.mxu0 0.0
        %1420 = vmatprep.subr.mxu0 0.0
        %1421 = vmatpush1.msra.mxu0 0.0
        %1422 = vmatprep.subr.mxu0 0.0
        %1423 = vmatpush1.msra.mxu0 0.0
        %1424 = vmatprep.subr.mxu0 0.0
        %1425 = vmatpush1.msra.mxu0 0.0
        %1426 = vmatprep.subr.mxu0 0.0
        %1427 = vmatpush1.msra.mxu0 0.0
        %1428 = vmatprep.subr.mxu0 0.0
        %1429 = vmatpush1.msra.mxu0 0.0
        %1430 = vmatprep.subr.mxu0 0.0
        %1431 = vmatpush1.msra.mxu0 0.0
        %1432 = vmatprep.subr.mxu0 0.0
        %1433 = vmatpush1.msra.mxu0 0.0
        %1434 = vmatprep.subr.mxu0 0.0
        %1435 = vmatpush1.msra.mxu0 0.0
        %1436 = vmatprep.mubr.f32.mxu0 0.0
        %1437 = vmatmul.mubr.f32.gmra.mrb[0].mxu0 %v1361
        %v1438 = vpop.f32.mrb[0].mxu0
        %v1439 = vadd.f32 %v1357, %v1438
        %v1440 = vpop.f32.mrb[0].mxu0
        %1441 = vmatprep.mubr.f32.mxu0 0.0
        %1442 = vmatmul.mubr.f32.gmra.mrb[0].mxu0 %v1364
        %v1443 = vpop.f32.mrb[0].mxu0
        %v1444 = vadd.f32 %v1357, %v1443
        %v1445 = vpop.f32.mrb[0].mxu0
        %1446 = vmatprep.mubr.f32.mxu0 0.0
        %1447 = vmatmul.mubr.f32.gmra.mrb[0].mxu0 %v1367
        %v1448 = vpop.f32.mrb[0].mxu0
        %v1449 = vadd.f32 %v1357, %v1448
        %v1450 = vpop.f32.mrb[0].mxu0
        %1451 = vmatprep.mubr.f32.mxu0 0.0
        %1452 = vmatmul.mubr.f32.gmra.mrb[0].mxu0 %v1370
        %v1453 = vpop.f32.mrb[0].mxu0
        %v1454 = vadd.f32 %v1357, %v1453
        %v1455 = vpop.f32.mrb[0].mxu0
        %1456 = vdwg.mxu0
        %v1457 = vmax.f32 %v1439, 0.0
        %v1458 = vmax.f32 %v1444, 0.0
        %v1459 = vmax.f32 %v1449, 0.0
        %v1460 = vmax.f32 %v1454, 0.0
        %v1461 = vld [vmem:[%s5] sm:$0xff]
        %v1462 = vld [vmem:[%s5 + $0x8] sm:$0xff]
        %v1463 = vld [vmem:[%s5 + $0x10] sm:$0xff]
        %v1464 = vld [vmem:[%s5 + $0x18] sm:$0xff]
        %v1465 = vld [vmem:[%s6] sm:$0x1]
        %v1467 = vlaneseq
        %v1468 = vshrl.u32 %v1467, 7
        %v1469 = vsub.s32 0, %v1468
        %v1470 = vrot.slane %v1465, %v1469
        %v1473 = vsel %vm1359, %v1457, 0
        %v1476 = vsel %vm1359, %v1458, 0
        %v1479 = vsel %vm1359, %v1459, 0
        %v1482 = vsel %vm1359, %v1460, 0
        %1484 = vmatprep.subr.mxu0 0.0
        %1485 = vmatpush1.msra.mxu0 %v1461
        %1486 = vmatprep.subr.mxu0 0.0
        %1487 = vmatpush1.msra.mxu0 %v1462
        %1488 = vmatprep.subr.mxu0 0.0
        %1489 = vmatpush1.msra.mxu0 %v1463
        %1490 = vmatprep.subr.mxu0 0.0
        %1491 = vmatpush1.msra.mxu0 %v1464
        %1492 = vmatprep.subr.mxu0 0.0
        %1493 = vmatpush1.msra.mxu0 0.0
        %1494 = vmatprep.subr.mxu0 0.0
        %1495 = vmatpush1.msra.mxu0 0.0
        %1496 = vmatprep.subr.mxu0 0.0
        %1497 = vmatpush1.msra.mxu0 0.0
        %1498 = vmatprep.subr.mxu0 0.0
        %1499 = vmatpush1.msra.mxu0 0.0
        %1500 = vmatprep.subr.mxu0 0.0
        %1501 = vmatpush1.msra.mxu0 0.0
        %1502 = vmatprep.subr.mxu0 0.0
        %1503 = vmatpush1.msra.mxu0 0.0
        %1504 = vmatprep.subr.mxu0 0.0
        %1505 = vmatpush1.msra.mxu0 0.0
        %1506 = vmatprep.subr.mxu0 0.0
        %1507 = vmatpush1.msra.mxu0 0.0
        %1508 = vmatprep.subr.mxu0 0.0
        %1509 = vmatpush1.msra.mxu0 0.0
        %1510 = vmatprep.subr.mxu0 0.0
        %1511 = vmatpush1.msra.mxu0 0.0
        %1512 = vmatprep.subr.mxu0 0.0
        %1513 = vmatpush1.msra.mxu0 0.0
        %1514 = vmatprep.subr.mxu0 0.0
        %1515 = vmatpush1.msra.mxu0 0.0
        %1516 = vmatprep.subr.mxu0 0.0
        %1517 = vmatpush1.msra.mxu0 0.0
        %1518 = vmatprep.subr.mxu0 0.0
        %1519 = vmatpush1.msra.mxu0 0.0
        %1520 = vmatprep.subr.mxu0 0.0
        %1521 = vmatpush1.msra.mxu0 0.0
        %1522 = vmatprep.subr.mxu0 0.0
        %1523 = vmatpush1.msra.mxu0 0.0
        %1524 = vmatprep.subr.mxu0 0.0
        %1525 = vmatpush1.msra.mxu0 0.0
        %1526 = vmatprep.subr.mxu0 0.0
        %1527 = vmatpush1.msra.mxu0 0.0
        %1528 = vmatprep.subr.mxu0 0.0
        %1529 = vmatpush1.msra.mxu0 0.0
        %1530 = vmatprep.subr.mxu0 0.0
        %1531 = vmatpush1.msra.mxu0 0.0
        %1532 = vmatprep.subr.mxu0 0.0
        %1533 = vmatpush1.msra.mxu0 0.0
        %1534 = vmatprep.subr.mxu0 0.0
        %1535 = vmatpush1.msra.mxu0 0.0
        %1536 = vmatprep.subr.mxu0 0.0
        %1537 = vmatpush1.msra.mxu0 0.0
        %1538 = vmatprep.subr.mxu0 0.0
        %1539 = vmatpush1.msra.mxu0 0.0
        %1540 = vmatprep.subr.mxu0 0.0
        %1541 = vmatpush1.msra.mxu0 0.0
        %1542 = vmatprep.subr.mxu0 0.0
        %1543 = vmatpush1.msra.mxu0 0.0
        %1544 = vmatprep.subr.mxu0 0.0
        %1545 = vmatpush1.msra.mxu0 0.0
        %1546 = vmatprep.subr.mxu0 0.0
        %1547 = vmatpush1.msra.mxu0 0.0
        %1548 = vmatprep.mubr.f32.mxu0 0.0
        %1549 = vmatmul.mubr.f32.gmra.mrb[0].mxu0 %v1473
        %v1550 = vpop.f32.mrb[0].mxu0
        %v1551 = vadd.f32 %v1470, %v1550
        %v1552 = vpop.f32.mrb[0].mxu0
        %1553 = vmatprep.mubr.f32.mxu0 0.0
        %1554 = vmatmul.mubr.f32.gmra.mrb[0].mxu0 %v1476
        %v1555 = vpop.f32.mrb[0].mxu0
        %v1556 = vadd.f32 %v1470, %v1555
        %v1557 = vpop.f32.mrb[0].mxu0
        %1558 = vmatprep.mubr.f32.mxu0 0.0
        %1559 = vmatmul.mubr.f32.gmra.mrb[0].mxu0 %v1479
        %v1560 = vpop.f32.mrb[0].mxu0
        %v1561 = vadd.f32 %v1470, %v1560
        %v1562 = vpop.f32.mrb[0].mxu0
        %1563 = vmatprep.mubr.f32.mxu0 0.0
        %1564 = vmatmul.mubr.f32.gmra.mrb[0].mxu0 %v1482
        %v1565 = vpop.f32.mrb[0].mxu0
        %v1566 = vadd.f32 %v1470, %v1565
        %v1567 = vpop.f32.mrb[0].mxu0
        %1568 = vdwg.mxu0
        %v1569 = vlaneseq
        %v1570 = vand.u32 %v1569, 127
        %1571 = vmin.xlane.f32.xlu0 %v1551
        %v1572 = vpop.xlane.xlu0 %1571
        %1573 = vmin.xlane.f32.xlu0 %v1556
        %v1574 = vpop.xlane.xlu0 %1573
        %1575 = vmin.xlane.f32.xlu0 %v1561
        %v1576 = vpop.xlane.xlu0 %1575
        %1577 = vmin.xlane.f32.xlu0 %v1566
        %v1578 = vpop.xlane.xlu0 %1577
        %vm1579 = vcmp.eq.f32.partialorder %v1551, %v1572
        %vm1580 = vcmp.eq.f32.partialorder %v1556, %v1574
        %vm1581 = vcmp.eq.f32.partialorder %v1561, %v1576
        %vm1582 = vcmp.eq.f32.partialorder %v1566, %v1578
        %v1583 = vsel %vm1579, %v1570, 128
        %v1584 = vsel %vm1580, %v1570, 128
        %v1585 = vsel %vm1581, %v1570, 128
        %v1586 = vsel %vm1582, %v1570, 128
        %v1587 = vand.u32 %v1583, 65535
        %v1588 = vshra.s32 %v1583, 16
        %v1589 = vcvt.s32.f32 %v1587
        %v1590 = vcvt.s32.f32 %v1588
        %1591 = vmin.xlane.f32.xlu0 %v1590
        %v1592 = vpop.xlane.xlu0 %1591
        %vm1593 = vcmp.eq.f32.partialorder %v1590, %v1592
        %v1594 = vsel %vm1593, %v1589, inf
        %1595 = vmin.xlane.f32.xlu0 %v1594
        %v1596 = vpop.xlane.xlu0 %1595
        %v1597 = vcvt.f32.s32 %v1596
        %v1598 = vcvt.f32.s32 %v1592
        %v1599 = vshll.u32 %v1598, 16
        %v1600 = vadd.s32 %v1599, %v1597
        %v1601 = vand.u32 %v1584, 65535
        %v1602 = vshra.s32 %v1584, 16
        %v1603 = vcvt.s32.f32 %v1601
        %v1604 = vcvt.s32.f32 %v1602
        %1605 = vmin.xlane.f32.xlu0 %v1604
        %v1606 = vpop.xlane.xlu0 %1605
        %vm1607 = vcmp.eq.f32.partialorder %v1604, %v1606
        %v1608 = vsel %vm1607, %v1603, inf
        %1609 = vmin.xlane.f32.xlu0 %v1608
        %v1610 = vpop.xlane.xlu0 %1609
        %v1611 = vcvt.f32.s32 %v1610
        %v1612 = vcvt.f32.s32 %v1606
        %v1613 = vshll.u32 %v1612, 16
        %v1614 = vadd.s32 %v1613, %v1611
        %v1615 = vand.u32 %v1585, 65535
        %v1616 = vshra.s32 %v1585, 16
        %v1617 = vcvt.s32.f32 %v1615
        %v1618 = vcvt.s32.f32 %v1616
        %1619 = vmin.xlane.f32.xlu0 %v1618
        %v1620 = vpop.xlane.xlu0 %1619
        %vm1621 = vcmp.eq.f32.partialorder %v1618, %v1620
        %v1622 = vsel %vm1621, %v1617, inf
        %1623 = vmin.xlane.f32.xlu0 %v1622
        %v1624 = vpop.xlane.xlu0 %1623
        %v1625 = vcvt.f32.s32 %v1624
        %v1626 = vcvt.f32.s32 %v1620
        %v1627 = vshll.u32 %v1626, 16
        %v1628 = vadd.s32 %v1627, %v1625
        %v1629 = vand.u32 %v1586, 65535
        %v1630 = vshra.s32 %v1586, 16
        %v1631 = vcvt.s32.f32 %v1629
        %v1632 = vcvt.s32.f32 %v1630
        %1633 = vmin.xlane.f32.xlu0 %v1632
        %v1634 = vpop.xlane.xlu0 %1633
        %vm1635 = vcmp.eq.f32.partialorder %v1632, %v1634
        %v1636 = vsel %vm1635, %v1631, inf
        %1637 = vmin.xlane.f32.xlu0 %v1636
        %v1638 = vpop.xlane.xlu0 %1637
        %v1639 = vcvt.f32.s32 %v1638
        %v1640 = vcvt.f32.s32 %v1634
        %v1641 = vshll.u32 %v1640, 16
        %v1642 = vadd.s32 %v1641, %v1639
        %vm1643 = vcmp.eq.s32.totalorder %v1570, %v1600
        %vm1644 = vcmp.eq.s32.totalorder %v1570, %v1614
        %vm1645 = vcmp.eq.s32.totalorder %v1570, %v1628
        %vm1646 = vcmp.eq.s32.totalorder %v1570, %v1642
        %v1647 = vsel %vm1643, 1, 0
        %v1648 = vsel %vm1644, 1, 0
        %v1649 = vsel %vm1645, 1, 0
        %v1650 = vsel %vm1646, 1, 0
        %v1651 = vcvt.s32.f32 %v1647
        %v1652 = vcvt.s32.f32 %v1648
        %v1653 = vcvt.s32.f32 %v1649
        %v1654 = vcvt.s32.f32 %v1650
        %v1655 = vld [vmem:[%s712] sm:$0xff]
        %v1656 = vld [vmem:[%s712 + $0x8] sm:$0xff]
        %v1657 = vld [vmem:[%s712 + $0x10] sm:$0xff]
        %v1658 = vld [vmem:[%s712 + $0x18] sm:$0xff]
        %v1659 = vadd.f32 %v1651, %v1655
        %v1660 = vadd.f32 %v1652, %v1656
        %v1661 = vadd.f32 %v1653, %v1657
        %v1662 = vadd.f32 %v1654, %v1658
        %v1663 = vld [vmem:[%s7] sm:$0xff]
        %v1664 = vld [vmem:[%s7 + $0x8] sm:$0xff]
        %v1665 = vld [vmem:[%s7 + $0x10] sm:$0xff]
        %v1666 = vld [vmem:[%s7 + $0x18] sm:$0xff]
        %v1667 = vld [vmem:[%s7 + $0x20] sm:$0xff]
        %v1668 = vld [vmem:[%s7 + $0x28] sm:$0xff]
        %v1669 = vld [vmem:[%s7 + $0x30] sm:$0xff]
        %v1670 = vld [vmem:[%s7 + $0x38] sm:$0xff]
        %v1671 = vld [vmem:[%s7 + $0x40] sm:$0xff]
        %v1672 = vld [vmem:[%s7 + $0x48] sm:$0xff]
        %v1673 = vld [vmem:[%s7 + $0x50] sm:$0xff]
        %v1674 = vld [vmem:[%s7 + $0x58] sm:$0xff]
        %v1675 = vld [vmem:[%s7 + $0x60] sm:$0xff]
        %v1676 = vld [vmem:[%s7 + $0x68] sm:$0xff]
        %v1677 = vld [vmem:[%s7 + $0x70] sm:$0xff]
        %v1678 = vld [vmem:[%s7 + $0x78] sm:$0xff]
        %v1679 = vld [vmem:[%s8] sm:$0x1]
        %v1681 = vlaneseq
        %v1682 = vshrl.u32 %v1681, 7
        %v1683 = vsub.s32 0, %v1682
        %v1684 = vrot.slane %v1679, %v1683
        %1686 = vmatprep.subr.mxu0 0.0
        %1687 = vmatpush1.msra.mxu0 %v1663
        %1688 = vmatprep.subr.mxu0 0.0
        %1689 = vmatpush1.msra.mxu0 %v1664
        %1690 = vmatprep.subr.mxu0 0.0
        %1691 = vmatpush1.msra.mxu0 %v1665
        %1692 = vmatprep.subr.mxu0 0.0
        %1693 = vmatpush1.msra.mxu0 %v1666
        %1694 = vmatprep.subr.mxu0 0.0
        %1695 = vmatpush1.msra.mxu0 %v1667
        %1696 = vmatprep.subr.mxu0 0.0
        %1697 = vmatpush1.msra.mxu0 %v1668
        %1698 = vmatprep.subr.mxu0 0.0
        %1699 = vmatpush1.msra.mxu0 %v1669
        %1700 = vmatprep.subr.mxu0 0.0
        %1701 = vmatpush1.msra.mxu0 %v1670
        %1702 = vmatprep.subr.mxu0 0.0
        %1703 = vmatpush1.msra.mxu0 %v1671
        %1704 = vmatprep.subr.mxu0 0.0
        %1705 = vmatpush1.msra.mxu0 %v1672
        %1706 = vmatprep.subr.mxu0 0.0
        %1707 = vmatpush1.msra.mxu0 %v1673
        %1708 = vmatprep.subr.mxu0 0.0
        %1709 = vmatpush1.msra.mxu0 %v1674
        %1710 = vmatprep.subr.mxu0 0.0
        %1711 = vmatpush1.msra.mxu0 %v1675
        %1712 = vmatprep.subr.mxu0 0.0
        %1713 = vmatpush1.msra.mxu0 %v1676
        %1714 = vmatprep.subr.mxu0 0.0
        %1715 = vmatpush1.msra.mxu0 %v1677
        %1716 = vmatprep.subr.mxu0 0.0
        %1717 = vmatpush1.msra.mxu0 %v1678
        %1718 = vmatprep.subr.mxu0 0.0
        %1719 = vmatpush1.msra.mxu0 0.0
        %1720 = vmatprep.subr.mxu0 0.0
        %1721 = vmatpush1.msra.mxu0 0.0
        %1722 = vmatprep.subr.mxu0 0.0
        %1723 = vmatpush1.msra.mxu0 0.0
        %1724 = vmatprep.subr.mxu0 0.0
        %1725 = vmatpush1.msra.mxu0 0.0
        %1726 = vmatprep.subr.mxu0 0.0
        %1727 = vmatpush1.msra.mxu0 0.0
        %1728 = vmatprep.subr.mxu0 0.0
        %1729 = vmatpush1.msra.mxu0 0.0
        %1730 = vmatprep.subr.mxu0 0.0
        %1731 = vmatpush1.msra.mxu0 0.0
        %1732 = vmatprep.subr.mxu0 0.0
        %1733 = vmatpush1.msra.mxu0 0.0
        %1734 = vmatprep.subr.mxu0 0.0
        %1735 = vmatpush1.msra.mxu0 0.0
        %1736 = vmatprep.subr.mxu0 0.0
        %1737 = vmatpush1.msra.mxu0 0.0
        %1738 = vmatprep.subr.mxu0 0.0
        %1739 = vmatpush1.msra.mxu0 0.0
        %1740 = vmatprep.subr.mxu0 0.0
        %1741 = vmatpush1.msra.mxu0 0.0
        %1742 = vmatprep.subr.mxu0 0.0
        %1743 = vmatpush1.msra.mxu0 0.0
        %1744 = vmatprep.subr.mxu0 0.0
        %1745 = vmatpush1.msra.mxu0 0.0
        %1746 = vmatprep.subr.mxu0 0.0
        %1747 = vmatpush1.msra.mxu0 0.0
        %1748 = vmatprep.subr.mxu0 0.0
        %1749 = vmatpush1.msra.mxu0 0.0
        %1750 = vmatprep.mubr.f32.mxu0 0.0
        %1751 = vmatmul.mubr.f32.gmra.mrb[0].mxu0 %v1659
        %v1752 = vpop.f32.mrb[0].mxu0
        %v1753 = vadd.f32 %v1684, %v1752
        %v1754 = vpop.f32.mrb[0].mxu0
        %1755 = vmatprep.mubr.f32.mxu0 0.0
        %1756 = vmatmul.mubr.f32.gmra.mrb[0].mxu0 %v1660
        %v1757 = vpop.f32.mrb[0].mxu0
        %v1758 = vadd.f32 %v1684, %v1757
        %v1759 = vpop.f32.mrb[0].mxu0
        %1760 = vmatprep.mubr.f32.mxu0 0.0
        %1761 = vmatmul.mubr.f32.gmra.mrb[0].mxu0 %v1661
        %v1762 = vpop.f32.mrb[0].mxu0
        %v1763 = vadd.f32 %v1684, %v1762
        %v1764 = vpop.f32.mrb[0].mxu0
        %1765 = vmatprep.mubr.f32.mxu0 0.0
        %1766 = vmatmul.mubr.f32.gmra.mrb[0].mxu0 %v1662
        %v1767 = vpop.f32.mrb[0].mxu0
        %v1768 = vadd.f32 %v1684, %v1767
        %v1769 = vpop.f32.mrb[0].mxu0
        %1770 = vdwg.mxu0
        %v1771 = vmax.f32 %v1753, 0.0
        %v1772 = vmax.f32 %v1758, 0.0
        %v1773 = vmax.f32 %v1763, 0.0
        %v1774 = vmax.f32 %v1768, 0.0
        %v1775 = vld [vmem:[%s9] sm:$0xff]
        %v1776 = vld [vmem:[%s9 + $0x8] sm:$0xff]
        %v1777 = vld [vmem:[%s9 + $0x10] sm:$0xff]
        %v1778 = vld [vmem:[%s9 + $0x18] sm:$0xff]
        %v1779 = vld [vmem:[%s10] sm:$0x1]
        %v1781 = vlaneseq
        %v1782 = vshrl.u32 %v1781, 7
        %v1783 = vsub.s32 0, %v1782
        %v1784 = vrot.slane %v1779, %v1783
        %v1787 = vsel %vm1359, %v1771, 0
        %v1790 = vsel %vm1359, %v1772, 0
        %v1793 = vsel %vm1359, %v1773, 0
        %v1796 = vsel %vm1359, %v1774, 0
        %1798 = vmatprep.subr.mxu0 0.0
        %1799 = vmatpush1.msra.mxu0 %v1775
        %1800 = vmatprep.subr.mxu0 0.0
        %1801 = vmatpush1.msra.mxu0 %v1776
        %1802 = vmatprep.subr.mxu0 0.0
        %1803 = vmatpush1.msra.mxu0 %v1777
        %1804 = vmatprep.subr.mxu0 0.0
        %1805 = vmatpush1.msra.mxu0 %v1778
        %1806 = vmatprep.subr.mxu0 0.0
        %1807 = vmatpush1.msra.mxu0 0.0
        %1808 = vmatprep.subr.mxu0 0.0
        %1809 = vmatpush1.msra.mxu0 0.0
        %1810 = vmatprep.subr.mxu0 0.0
        %1811 = vmatpush1.msra.mxu0 0.0
        %1812 = vmatprep.subr.mxu0 0.0
        %1813 = vmatpush1.msra.mxu0 0.0
        %1814 = vmatprep.subr.mxu0 0.0
        %1815 = vmatpush1.msra.mxu0 0.0
        %1816 = vmatprep.subr.mxu0 0.0
        %1817 = vmatpush1.msra.mxu0 0.0
        %1818 = vmatprep.subr.mxu0 0.0
        %1819 = vmatpush1.msra.mxu0 0.0
        %1820 = vmatprep.subr.mxu0 0.0
        %1821 = vmatpush1.msra.mxu0 0.0
        %1822 = vmatprep.subr.mxu0 0.0
        %1823 = vmatpush1.msra.mxu0 0.0
        %1824 = vmatprep.subr.mxu0 0.0
        %1825 = vmatpush1.msra.mxu0 0.0
        %1826 = vmatprep.subr.mxu0 0.0
        %1827 = vmatpush1.msra.mxu0 0.0
        %1828 = vmatprep.subr.mxu0 0.0
        %1829 = vmatpush1.msra.mxu0 0.0
        %1830 = vmatprep.subr.mxu0 0.0
        %1831 = vmatpush1.msra.mxu0 0.0
        %1832 = vmatprep.subr.mxu0 0.0
        %1833 = vmatpush1.msra.mxu0 0.0
        %1834 = vmatprep.subr.mxu0 0.0
        %1835 = vmatpush1.msra.mxu0 0.0
        %1836 = vmatprep.subr.mxu0 0.0
        %1837 = vmatpush1.msra.mxu0 0.0
        %1838 = vmatprep.subr.mxu0 0.0
        %1839 = vmatpush1.msra.mxu0 0.0
        %1840 = vmatprep.subr.mxu0 0.0
        %1841 = vmatpush1.msra.mxu0 0.0
        %1842 = vmatprep.subr.mxu0 0.0
        %1843 = vmatpush1.msra.mxu0 0.0
        %1844 = vmatprep.subr.mxu0 0.0
        %1845 = vmatpush1.msra.mxu0 0.0
        %1846 = vmatprep.subr.mxu0 0.0
        %1847 = vmatpush1.msra.mxu0 0.0
        %1848 = vmatprep.subr.mxu0 0.0
        %1849 = vmatpush1.msra.mxu0 0.0
        %1850 = vmatprep.subr.mxu0 0.0
        %1851 = vmatpush1.msra.mxu0 0.0
        %1852 = vmatprep.subr.mxu0 0.0
        %1853 = vmatpush1.msra.mxu0 0.0
        %1854 = vmatprep.subr.mxu0 0.0
        %1855 = vmatpush1.msra.mxu0 0.0
        %1856 = vmatprep.subr.mxu0 0.0
        %1857 = vmatpush1.msra.mxu0 0.0
        %1858 = vmatprep.subr.mxu0 0.0
        %1859 = vmatpush1.msra.mxu0 0.0
        %1860 = vmatprep.subr.mxu0 0.0
        %1861 = vmatpush1.msra.mxu0 0.0
        %1862 = vmatprep.mubr.f32.mxu0 0.0
        %1863 = vmatmul.mubr.f32.gmra.mrb[0].mxu0 %v1787
        %v1864 = vpop.f32.mrb[0].mxu0
        %v1865 = vadd.f32 %v1784, %v1864
        %v1866 = vpop.f32.mrb[0].mxu0
        %1867 = vmatprep.mubr.f32.mxu0 0.0
        %1868 = vmatmul.mubr.f32.gmra.mrb[0].mxu0 %v1790
        %v1869 = vpop.f32.mrb[0].mxu0
        %v1870 = vadd.f32 %v1784, %v1869
        %v1871 = vpop.f32.mrb[0].mxu0
        %1872 = vmatprep.mubr.f32.mxu0 0.0
        %1873 = vmatmul.mubr.f32.gmra.mrb[0].mxu0 %v1793
        %v1874 = vpop.f32.mrb[0].mxu0
        %v1875 = vadd.f32 %v1784, %v1874
        %v1876 = vpop.f32.mrb[0].mxu0
        %1877 = vmatprep.mubr.f32.mxu0 0.0
        %1878 = vmatmul.mubr.f32.gmra.mrb[0].mxu0 %v1796
        %v1879 = vpop.f32.mrb[0].mxu0
        %v1880 = vadd.f32 %v1784, %v1879
        %v1881 = vpop.f32.mrb[0].mxu0
        %1882 = vdwg.mxu0
        %v1883 = vmax.f32 %v1865, 0.0
        %v1884 = vmax.f32 %v1870, 0.0
        %v1885 = vmax.f32 %v1875, 0.0
        %v1886 = vmax.f32 %v1880, 0.0
        %v1887 = vld [vmem:[%s11] sm:$0xff]
        %v1888 = vld [vmem:[%s11 + $0x8] sm:$0xff]
        %v1889 = vld [vmem:[%s11 + $0x10] sm:$0xff]
        %v1890 = vld [vmem:[%s11 + $0x18] sm:$0xff]
        %v1891 = vld [vmem:[%s12] sm:$0x1]
        %v1893 = vlaneseq
        %v1894 = vshrl.u32 %v1893, 7
        %v1895 = vsub.s32 0, %v1894
        %v1896 = vrot.slane %v1891, %v1895
        %v1899 = vsel %vm1359, %v1883, 0
        %v1902 = vsel %vm1359, %v1884, 0
        %v1905 = vsel %vm1359, %v1885, 0
        %v1908 = vsel %vm1359, %v1886, 0
        %1910 = vmatprep.subr.mxu0 0.0
        %1911 = vmatpush1.msra.mxu0 %v1887
        %1912 = vmatprep.subr.mxu0 0.0
        %1913 = vmatpush1.msra.mxu0 %v1888
        %1914 = vmatprep.subr.mxu0 0.0
        %1915 = vmatpush1.msra.mxu0 %v1889
        %1916 = vmatprep.subr.mxu0 0.0
        %1917 = vmatpush1.msra.mxu0 %v1890
        %1918 = vmatprep.subr.mxu0 0.0
        %1919 = vmatpush1.msra.mxu0 0.0
        %1920 = vmatprep.subr.mxu0 0.0
        %1921 = vmatpush1.msra.mxu0 0.0
        %1922 = vmatprep.subr.mxu0 0.0
        %1923 = vmatpush1.msra.mxu0 0.0
        %1924 = vmatprep.subr.mxu0 0.0
        %1925 = vmatpush1.msra.mxu0 0.0
        %1926 = vmatprep.subr.mxu0 0.0
        %1927 = vmatpush1.msra.mxu0 0.0
        %1928 = vmatprep.subr.mxu0 0.0
        %1929 = vmatpush1.msra.mxu0 0.0
        %1930 = vmatprep.subr.mxu0 0.0
        %1931 = vmatpush1.msra.mxu0 0.0
        %1932 = vmatprep.subr.mxu0 0.0
        %1933 = vmatpush1.msra.mxu0 0.0
        %1934 = vmatprep.subr.mxu0 0.0
        %1935 = vmatpush1.msra.mxu0 0.0
        %1936 = vmatprep.subr.mxu0 0.0
        %1937 = vmatpush1.msra.mxu0 0.0
        %1938 = vmatprep.subr.mxu0 0.0
        %1939 = vmatpush1.msra.mxu0 0.0
        %1940 = vmatprep.subr.mxu0 0.0
        %1941 = vmatpush1.msra.mxu0 0.0
        %1942 = vmatprep.subr.mxu0 0.0
        %1943 = vmatpush1.msra.mxu0 0.0
        %1944 = vmatprep.subr.mxu0 0.0
        %1945 = vmatpush1.msra.mxu0 0.0
        %1946 = vmatprep.subr.mxu0 0.0
        %1947 = vmatpush1.msra.mxu0 0.0
        %1948 = vmatprep.subr.mxu0 0.0
        %1949 = vmatpush1.msra.mxu0 0.0
        %1950 = vmatprep.subr.mxu0 0.0
        %1951 = vmatpush1.msra.mxu0 0.0
        %1952 = vmatprep.subr.mxu0 0.0
        %1953 = vmatpush1.msra.mxu0 0.0
        %1954 = vmatprep.subr.mxu0 0.0
        %1955 = vmatpush1.msra.mxu0 0.0
        %1956 = vmatprep.subr.mxu0 0.0
        %1957 = vmatpush1.msra.mxu0 0.0
        %1958 = vmatprep.subr.mxu0 0.0
        %1959 = vmatpush1.msra.mxu0 0.0
        %1960 = vmatprep.subr.mxu0 0.0
        %1961 = vmatpush1.msra.mxu0 0.0
        %1962 = vmatprep.subr.mxu0 0.0
        %1963 = vmatpush1.msra.mxu0 0.0
        %1964 = vmatprep.subr.mxu0 0.0
        %1965 = vmatpush1.msra.mxu0 0.0
        %1966 = vmatprep.subr.mxu0 0.0
        %1967 = vmatpush1.msra.mxu0 0.0
        %1968 = vmatprep.subr.mxu0 0.0
        %1969 = vmatpush1.msra.mxu0 0.0
        %1970 = vmatprep.subr.mxu0 0.0
        %1971 = vmatpush1.msra.mxu0 0.0
        %1972 = vmatprep.subr.mxu0 0.0
        %1973 = vmatpush1.msra.mxu0 0.0
        %1974 = vmatprep.mubr.f32.mxu0 0.0
        %1975 = vmatmul.mubr.f32.gmra.mrb[0].mxu0 %v1899
        %v1976 = vpop.f32.mrb[0].mxu0
        %v1977 = vadd.f32 %v1896, %v1976
        %v1978 = vpop.f32.mrb[0].mxu0
        %1979 = vmatprep.mubr.f32.mxu0 0.0
        %1980 = vmatmul.mubr.f32.gmra.mrb[0].mxu0 %v1902
        %v1981 = vpop.f32.mrb[0].mxu0
        %v1982 = vadd.f32 %v1896, %v1981
        %v1983 = vpop.f32.mrb[0].mxu0
        %1984 = vmatprep.mubr.f32.mxu0 0.0
        %1985 = vmatmul.mubr.f32.gmra.mrb[0].mxu0 %v1905
        %v1986 = vpop.f32.mrb[0].mxu0
        %v1987 = vadd.f32 %v1896, %v1986
        %v1988 = vpop.f32.mrb[0].mxu0
        %1989 = vmatprep.mubr.f32.mxu0 0.0
        %1990 = vmatmul.mubr.f32.gmra.mrb[0].mxu0 %v1908
        %v1991 = vpop.f32.mrb[0].mxu0
        %v1992 = vadd.f32 %v1896, %v1991
        %v1993 = vpop.f32.mrb[0].mxu0
        %1994 = vdwg.mxu0
        %vm1995 = vcmask 23552
        %1996 = vst.msk [vmem:[%s718] sm:$0xff] %vm1995, %v1977
        %1997 = vst.msk [vmem:[%s718 + $0x8] sm:$0xff] %vm1995, %v1982
        %1998 = vst.msk [vmem:[%s718 + $0x10] sm:$0xff] %vm1995, %v1987
        %1999 = vst.msk [vmem:[%s718 + $0x18] sm:$0xff] %vm1995, %v1992
        %s2000 = smul.u32 4, %s24
        %p2001 = scmp.lt.s32.totalorder %s2000, 7
        %s2002 = scalar_select %p2001, %s2000, 7
        %s2003 = smul.addr %s2002, 8
        %s2004 = scalar_lea.vmem %s13, %s2003
        // Predicated region
        $region111: #{conditional_vqvae_forward.1} parent=105 // pred_check
          %p2005 = pneg %p325
        $region112: #{conditional_vqvae_forward.1} parent=105 // pred_check_branch
          %2007 = sbr.rel (%p2005) target = $region114
        $region113: #{conditional_vqvae_forward.1} parent=105 // pred_region
          %s2008 = smul.u32 4, %s24
        $region114: #{conditional_vqvae_forward.1} parent=105 // pred_fallthru
          _
      $region106: #{conditional_vqvae_forward.1} parent=5 // pred_fallthru
        _
      %p2009 = scmp.le.s32.totalorder 2, %s19
      // Predicated region
      $region115: #{conditional_vqvae_forward.1} parent=5 // pred_check
        %p2010 = pneg %p2009
      $region116: #{conditional_vqvae_forward.1} parent=5 // pred_check_branch
        %2012 = sbr.rel (%p2010) target = $region118
      $region117: #{conditional_vqvae_forward.1} parent=5 // pred_region
        %s2013 = ssub.s32 %s19, 2
        // Predicated region
        $region119: #{conditional_vqvae_forward.1} parent=117 // pred_check
          %p2014 = pneg %p331
        $region120: #{conditional_vqvae_forward.1} parent=117 // pred_check_branch
          %2016 = sbr.rel (%p2014) target = $region122
        $region121: #{conditional_vqvae_forward.1} parent=117 // pred_region
          %s2017 = smul.u32 4, %s25
          %p2018 = scmp.lt.s32.totalorder %s2017, 7
          %s2019 = scalar_select %p2018, %s2017, 7
          %s2020 = smul.addr %s2019, 8
          %s2021 = scalar_lea.vmem %s13, %s2020
        $region122: #{conditional_vqvae_forward.1} parent=117 // pred_fallthru
          _
      $region118: #{conditional_vqvae_forward.1} parent=5 // pred_fallthru
        _
    $region6: #{conditional_vqvae_forward.1} parent=1 // loop_footer
      %s23 = sadd.s32 1, %s19
    $region7: #{conditional_vqvae_forward.1} parent=1 // loop_footer_branch
      %18 = sbr.rel target = $region3
    $region8: #{conditional_vqvae_forward.1} parent=1 // loop_exit
      _

</llo_original>
